<compile_context>
chip_gen: v5e
topology: v5e:2x2
jax: 0.10.0
libtpu: 0.0.40
codegen_flags: <defaults>
</compile_context>

<pallas_src>
import functools

import numpy as np
import jax
import jax.numpy as jnp
from jax.experimental import pallas as pl
from jax.experimental.pallas import tpu as pltpu

BN_EPS = 1e-5
VMEM_LIMIT = 32 * 1024 * 1024  # <= v7x default scoped VMEM; leaves headroom on 64 MiB parts


# ----------------------------------------------------------------------------
# Pallas kernels
# ----------------------------------------------------------------------------
def _mm_bias_kernel(x_ref, w_ref, b_ref, o_ref, *, apply_relu):
    """o = relu?(x @ w + bias), full K in one shot (no accumulator scratch)."""
    y = jnp.dot(x_ref[...], w_ref[...], preferred_element_type=jnp.float32) + b_ref[...]
    if apply_relu:
        y = jnp.maximum(y, 0.0)
    o_ref[...] = y.astype(o_ref.dtype)


def _mm_bias_res_kernel(x_ref, w_ref, b_ref, r_ref, o_ref, *, apply_relu):
    """o = relu?(x @ w + bias + residual), full K in one shot (Bottleneck conv3 epilogue)."""
    y = (jnp.dot(x_ref[...], w_ref[...], preferred_element_type=jnp.float32)
         + b_ref[...] + r_ref[...].astype(jnp.float32))
    if apply_relu:
        y = jnp.maximum(y, 0.0)
    o_ref[...] = y.astype(o_ref.dtype)


def _mm_bias_acc_kernel(x_ref, w_ref, b_ref, o_ref, acc_ref, *, apply_relu, nk):
    """K split over grid axis 2; f32 VMEM accumulator with pl.when init/finalize."""
    @pl.when(pl.program_id(2) == 0)
    def _init():
        acc_ref[...] = jnp.zeros_like(acc_ref)

    acc_ref[...] += jnp.dot(x_ref[...], w_ref[...], preferred_element_type=jnp.float32)

    @pl.when(pl.program_id(2) == nk - 1)
    def _finalize():
        y = acc_ref[...] + b_ref[...]
        if apply_relu:
            y = jnp.maximum(y, 0.0)
        o_ref[...] = y.astype(o_ref.dtype)


def _mm_bias_res_acc_kernel(x_ref, w_ref, b_ref, r_ref, o_ref, acc_ref, *, apply_relu, nk):
    @pl.when(pl.program_id(2) == 0)
    def _init():
        acc_ref[...] = jnp.zeros_like(acc_ref)

    acc_ref[...] += jnp.dot(x_ref[...], w_ref[...], preferred_element_type=jnp.float32)

    @pl.when(pl.program_id(2) == nk - 1)
    def _finalize():
        y = acc_ref[...] + b_ref[...] + r_ref[...].astype(jnp.float32)
        if apply_relu:
            y = jnp.maximum(y, 0.0)
        o_ref[...] = y.astype(o_ref.dtype)


def _maxpool_kernel(xee_ref, xeo_ref, xoe_ref, xoo_ref, o_ref, *, OH, OW):
    """3x3/stride-2/pad-1 max pool from four parity-decimated views; unrolled VPU maximum."""
    xee = xee_ref[...]
    xeo = xeo_ref[...]
    xoe = xoe_ref[...]
    xoo = xoo_ref[...]
    taps = (
        xee[:, 0:OH, 0:OW, :], xeo[:, 0:OH, 0:OW, :], xee[:, 0:OH, 1:OW + 1, :],
        xoe[:, 0:OH, 0:OW, :], xoo[:, 0:OH, 0:OW, :], xoe[:, 0:OH, 1:OW + 1, :],
        xee[:, 1:OH + 1, 0:OW, :], xeo[:, 1:OH + 1, 0:OW, :], xee[:, 1:OH + 1, 1:OW + 1, :],
    )
    m = taps[0]
    for t in taps[1:]:
        m = jnp.maximum(m, t)
    o_ref[...] = m.astype(o_ref.dtype)


def _head_kernel(x_ref, w1, b1, w2, b2, w3, b3, w4, b4, wf, bf, o_ref):
    """Fused GAP -> 4x(Linear+BN1d+ReLU) -> Linear -> softmax.  Activations stay in VMEM."""
    h = jnp.mean(x_ref[...].astype(jnp.float32), axis=1)          # AdaptiveAvgPool2d + flatten
    for w_ref, b_ref in ((w1, b1), (w2, b2), (w3, b3), (w4, b4)):
        z = jnp.dot(h.astype(jnp.bfloat16), w_ref[...],
                    preferred_element_type=jnp.float32) + b_ref[...]
        h = jnp.maximum(z, 0.0)                                    # Dropout = identity (eval)
    logits = jnp.dot(h.astype(jnp.bfloat16), wf[...],
                     preferred_element_type=jnp.float32) + bf[...]
    mx = jnp.max(logits, axis=-1, keepdims=True)
    e = jnp.exp(logits - mx)
    o_ref[...] = (e / jnp.sum(e, axis=-1, keepdims=True)).astype(o_ref.dtype)


# ----------------------------------------------------------------------------
# Tiling helpers + Pallas wrappers
# ----------------------------------------------------------------------------
def _round_up(x, m):
    return (x + m - 1) // m * m


def _choose_tiles(M, N, K):
    # M tile: multiple of 8 sublanes, capped at 256 rows (bounded VMEM + a parallel grid axis).
    if M <= 256:
        Mp = _round_up(M, 8)
        tm = Mp
    else:
        Mp = _round_up(M, 256)
        tm = 256
    # N tile: multiple of 128 lanes or the full dim.
    if N <= 512:
        tn = N
    else:
        tn = next((t for t in (512, 256, 128) if N % t == 0), N)
    # K tile: split only if the full-K bf16 x/w tiles (double-buffered) would blow VMEM.
    tk = K
    if 4 * (tm * K + K * tn) > 24 * 1024 * 1024:
        for m in range(min(K // 128, 8), 0, -1):      # largest multiple of 128 that is <= 1024
            if K % (128 * m) == 0:
                tk = 128 * m
                break
    return Mp, tm, tn, tk


def matmul_bias(x, w, b, residual=None, relu=False):
    """relu?(x @ w + b [+ residual]) with bf16 operands and f32 accumulation (fused epilogue)."""
    M, K = x.shape
    N = w.shape[1]
    Mp, tm, tn, tk = _choose_tiles(M, N, K)
    x = x.astype(jnp.bfloat16)
    if Mp != M:
        x = jnp.pad(x, ((0, Mp - M), (0, 0)))
    w = w.astype(jnp.bfloat16)
    b2 = b.reshape(1, N).astype(jnp.float32)
    args = [x, w, b2]
    with_res = residual is not None
    if with_res:
        r = residual.astype(jnp.bfloat16)
        if Mp != M:
            r = jnp.pad(r, ((0, Mp - M), (0, 0)))
        args.append(r)

    nk = K // tk
    if nk == 1:
        kernel = functools.partial(
            _mm_bias_res_kernel if with_res else _mm_bias_kernel, apply_relu=relu)
        in_specs = [
            pl.BlockSpec((tm, K), lambda i, j: (i, 0)),
            pl.BlockSpec((K, tn), lambda i, j: (0, j)),
            pl.BlockSpec((1, tn), lambda i, j: (0, j)),
        ]
        if with_res:
            in_specs.append(pl.BlockSpec((tm, tn), lambda i, j: (i, j)))
        y = pl.pallas_call(
            kernel,
            out_shape=jax.ShapeDtypeStruct((Mp, N), jnp.bfloat16),
            grid=(Mp // tm, N // tn),
            in_specs=in_specs,
            out_specs=pl.BlockSpec((tm, tn), lambda i, j: (i, j)),
            compiler_params=pltpu.CompilerParams(
                dimension_semantics=("parallel", "parallel"),
                vmem_limit_bytes=VMEM_LIMIT,
            ),
        )(*args)
    else:
        kernel = functools.partial(
            _mm_bias_res_acc_kernel if with_res else _mm_bias_acc_kernel,
            apply_relu=relu, nk=nk)
        in_specs = [
            pl.BlockSpec((tm, tk), lambda i, j, k: (i, k)),
            pl.BlockSpec((tk, tn), lambda i, j, k: (k, j)),
            pl.BlockSpec((1, tn), lambda i, j, k: (0, j)),
        ]
        if with_res:
            in_specs.append(pl.BlockSpec((tm, tn), lambda i, j, k: (i, j)))
        y = pl.pallas_call(
            kernel,
            out_shape=jax.ShapeDtypeStruct((Mp, N), jnp.bfloat16),
            grid=(Mp // tm, N // tn, nk),
            in_specs=in_specs,
            out_specs=pl.BlockSpec((tm, tn), lambda i, j, k: (i, j)),
            scratch_shapes=[pltpu.VMEM((tm, tn), jnp.float32)],
            compiler_params=pltpu.CompilerParams(
                dimension_semantics=("parallel", "parallel", "arbitrary"),
                vmem_limit_bytes=VMEM_LIMIT,
            ),
        )(*args)
    return y if Mp == M else y[:M]


def maxpool_3x3_s2_p1(x):
    """nn.MaxPool2d(kernel_size=3, stride=2, padding=1) on NHWC (H, W even)."""
    N, H, W, C = x.shape
    assert H % 2 == 0 and W % 2 == 0
    OH, OW = H // 2, W // 2
    xp = jnp.pad(x, ((0, 0), (1, 1), (1, 1), (0, 0)), constant_values=-np.inf)
    # Four parity-decimated views partition the padded input (~1x HBM traffic, not 9x).
    xee = xp[:, 0::2, 0::2, :]
    xeo = xp[:, 0::2, 1::2, :]
    xoe = xp[:, 1::2, 0::2, :]
    xoo = xp[:, 1::2, 1::2, :]
    kernel = functools.partial(_maxpool_kernel, OH=OH, OW=OW)
    spec_in = pl.BlockSpec((1, OH + 1, OW + 1, C), lambda n: (n, 0, 0, 0))
    return pl.pallas_call(
        kernel,
        out_shape=jax.ShapeDtypeStruct((N, OH, OW, C), x.dtype),
        grid=(N,),
        in_specs=[spec_in, spec_in, spec_in, spec_in],
        out_specs=pl.BlockSpec((1, OH, OW, C), lambda n: (n, 0, 0, 0)),
        compiler_params=pltpu.CompilerParams(
            dimension_semantics=("parallel",),
            vmem_limit_bytes=VMEM_LIMIT,
        ),
    )(xee, xeo, xoe, xoo)


@jax.jit
def classifier_head(x, cls_hidden, cls_final):
    """Single fused pallas_call for GAP -> MLP head -> softmax (weights ~5.3 MiB bf16)."""
    (w1, b1), (w2, b2), (w3, b3), (w4, b4) = cls_hidden
    wf, bf = cls_final
    N, H, W, C = x.shape
    xr = x.reshape(N, H * W, C)
    nc = wf.shape[1]
    return pl.pallas_call(
        _head_kernel,
        out_shape=jax.ShapeDtypeStruct((N, nc), jnp.float32),
        compiler_params=pltpu.CompilerParams(vmem_limit_bytes=VMEM_LIMIT),
    )(xr, w1, b1, w2, b2, w3, b3, w4, b4, wf, bf)


# ----------------------------------------------------------------------------
# Conv = im2col (glue, fused by XLA inside the per-stage jits) + fused Pallas matmul
# ----------------------------------------------------------------------------
def im2col(x, k, stride, pad):
    N, H, W, C = x.shape
    if pad:
        x = jnp.pad(x, ((0, 0), (pad, pad), (pad, pad), (0, 0)))
    Hp, Wp = H + 2 * pad, W + 2 * pad
    OH = (Hp - k) // stride + 1
    OW = (Wp - k) // stride + 1
    if k == 1 and stride == 1:
        return x.reshape(N * OH * OW, C), OH, OW
    cols = []
    for i in range(k):
        for j in range(k):
            cols.append(x[:, i:i + stride * (OH - 1) + 1:stride,
                           j:j + stride * (OW - 1) + 1:stride, :])
    patches = cols[0] if k == 1 else jnp.concatenate(cols, axis=-1)
    return patches.reshape(N * OH * OW, k * k * C), OH, OW


def conv_bn(x, w, b, *, k, stride, pad, relu, residual=None):
    N, H, W, cin = x.shape
    if k == 3 and stride == 1 and pad == 1 and H == 1 and W == 1:
        # 3x3 pad-1 conv on a 1x1 map: only the centre tap sees non-padding input -> exact 1x1 conv.
        w = w[4 * cin:5 * cin]
        k, pad = 1, 0
    cols, OH, OW = im2col(x, k, stride, pad)
    cout = w.shape[1]
    res2d = None if residual is None else residual.reshape(N * OH * OW, cout)
    y = matmul_bias(cols, w, b, residual=res2d, relu=relu)
    return y.reshape(N, OH, OW, cout)


# ----------------------------------------------------------------------------
# Parameter construction (deterministic, synthetic; BN folded, bf16 weights)
# ----------------------------------------------------------------------------
class KeyGen:
    def __init__(self, seed):
        self._key = jax.random.PRNGKey(seed)

    def __call__(self):
        self._key, sub = jax.random.split(self._key)
        return sub


def make_conv_w(kg, cin, cout, k):
    # kaiming_normal(fan_out, relu) as in torchvision ResNet; stored as (k*k*cin, cout)
    fan_out = cout * k * k
    w = jax.random.normal(kg(), (k, k, cin, cout), jnp.float32) * np.sqrt(2.0 / fan_out)
    return w.reshape(k * k * cin, cout)


def fold_bn(w, cout):
    # eval-mode BN, default init (gamma=1, beta=0, mean=0, var=1):
    #   per-channel scale 1/sqrt(1+eps) folded into the weight columns; bias = 0.
    scale = 1.0 / np.sqrt(1.0 + BN_EPS)
    return (w * scale).astype(jnp.bfloat16), jnp.zeros((cout,), jnp.float32)


def make_bottleneck_params(kg, inplanes, planes, stride):
    p = {}
    p["w1"], p["b1"] = fold_bn(make_conv_w(kg, inplanes, planes, 1), planes)
    p["w2"], p["b2"] = fold_bn(make_conv_w(kg, planes, planes, 3), planes)
    p["w3"], p["b3"] = fold_bn(make_conv_w(kg, planes, planes * 4, 1), planes * 4)
    if stride != 1 or inplanes != planes * 4:
        p["wd"], p["bd"] = fold_bn(make_conv_w(kg, inplanes, planes * 4, 1), planes * 4)
    return p


LAYER_CFG = [(64, 3, 1), (128, 4, 2), (256, 23, 2), (512, 3, 2)]   # ResNet-101 Bottleneck config


def build_params(seed=0, num_classes=7):
    kg = KeyGen(seed)
    params = {}
    params["conv1_w"], params["conv1_b"] = fold_bn(make_conv_w(kg, 3, 64, 7), 64)
    inplanes = 64
    layers = []
    for planes, blocks, stride in LAYER_CFG:
        layer = [make_bottleneck_params(kg, inplanes, planes, stride)]
        inplanes = planes * 4
        for _ in range(blocks - 1):
            layer.append(make_bottleneck_params(kg, inplanes, planes, 1))
        layers.append(layer)
    params["layers"] = layers
    # classifier head: [Linear -> BN1d -> ReLU -> Dropout] x 4 -> Linear(num_classes)
    hidden = [1024, 512, 256, 128]
    fin = 2048
    bn_scale = 1.0 / np.sqrt(1.0 + BN_EPS)
    cls_hidden = []
    for fout in hidden:
        bound = float(np.sqrt(6.0 / fin))   # kaiming_uniform_(nonlinearity='relu'), fan_in
        w = jax.random.uniform(kg(), (fin, fout), jnp.float32, -bound, bound)
        cls_hidden.append(((w * bn_scale).astype(jnp.bfloat16),
                           jnp.zeros((1, fout), jnp.float32)))
        fin = fout
    params["cls_hidden"] = cls_hidden
    bound = float(np.sqrt(6.0 / fin))
    wf = jax.random.uniform(kg(), (fin, num_classes), jnp.float32, -bound, bound)
    params["cls_final"] = (wf.astype(jnp.bfloat16), jnp.zeros((1, num_classes), jnp.float32))
    return params


# ----------------------------------------------------------------------------
# Forward pass (mirrors resnet50_add.forward, eval mode)
# ----------------------------------------------------------------------------
@jax.jit
def stem_fwd(x_nchw, w, b):
    x = jnp.transpose(x_nchw, (0, 2, 3, 1)).astype(jnp.bfloat16)   # NCHW -> NHWC, bf16 activations
    x = conv_bn(x, w, b, k=7, stride=2, pad=3, relu=True)          # conv1 -> bn1 -> relu
    return maxpool_3x3_s2_p1(x)


@functools.partial(jax.jit, static_argnames=("stride",))
def bottleneck_fwd(x, p, *, stride):
    identity = x
    out = conv_bn(x, p["w1"], p["b1"], k=1, stride=1, pad=0, relu=True)
    out = conv_bn(out, p["w2"], p["b2"], k=3, stride=stride, pad=1, relu=True)
    if "wd" in p:
        identity = conv_bn(x, p["wd"], p["bd"], k=1, stride=stride, pad=0, relu=False)
    # conv3 + bn3 + residual add + relu fused into a single Pallas matmul epilogue
    return conv_bn(out, p["w3"], p["b3"], k=1, stride=1, pad=0, relu=True, residual=identity)


def forward(params, x_nchw):
    x = stem_fwd(x_nchw, params["conv1_w"], params["conv1_b"])
    for layer, (_, _, layer_stride) in zip(params["layers"], LAYER_CFG):
        for bi, blk in enumerate(layer):
            x = bottleneck_fwd(x, blk, stride=layer_stride if bi == 0 else 1)
    # fused GAP -> classifier MLP -> softmax (single pallas_call, VMEM-resident)
    return classifier_head(x, params["cls_hidden"], params["cls_final"])


if __name__ == "__main__":
    # Small input consistent with the module: batch=2, 3 channels, 32x32 spatial
    # (32x32 shrinks to 1x1 after layer4, feeding the 2048-wide classifier as required).
    key = jax.random.PRNGKey(0)
    x = jax.random.normal(key, (2, 3, 32, 32), jnp.float32)

    params = build_params(seed=0, num_classes=7)
    probs = forward(params, x)
    probs = jax.block_until_ready(probs)

    assert probs.shape == (2, 7)
    assert bool(jnp.all(jnp.isfinite(probs)))
    assert bool(jnp.allclose(jnp.sum(probs, axis=1), 1.0, atol=1e-5))
    print("KERNEL_OK")
</pallas_src>

<mosaic_0001>
module attributes {stable_mosaic.version = 11 : i64} {
  func.func @_mm_bias_kernel(%arg0: i32, %arg1: i32, %arg2: memref<256x147xbf16, #tpu.memory_space<vmem>>, %arg3: memref<147x64xbf16, #tpu.memory_space<vmem>>, %arg4: memref<1x64xf32, #tpu.memory_space<vmem>>, %arg5: memref<256x64xbf16, #tpu.memory_space<vmem>>) attributes {dimension_semantics = [#tpu.dimension_semantics<parallel>, #tpu.dimension_semantics<parallel>], iteration_bounds = array<i64: 2, 1>, scalar_prefetch = 0 : i64, scratch_operands = 0 : i64, tpu.core_type = #tpu.core_type<tc>, window_params = [{transform_indices = @transform_0, window_bounds = array<i64: 256, 147>}, {transform_indices = @transform_1, window_bounds = array<i64: 147, 64>}, {transform_indices = @transform_2, window_bounds = array<i64: 1, 64>}, {transform_indices = @transform_3, window_bounds = array<i64: 256, 64>}]} {
    %c0 = arith.constant 0 : index
    %c0_0 = arith.constant 0 : index
    %0 = vector.load %arg2[%c0, %c0_0] : memref<256x147xbf16, #tpu.memory_space<vmem>>, vector<256x147xbf16>
    %c0_1 = arith.constant 0 : index
    %c0_2 = arith.constant 0 : index
    %1 = vector.load %arg3[%c0_1, %c0_2] : memref<147x64xbf16, #tpu.memory_space<vmem>>, vector<147x64xbf16>
    %cst = arith.constant dense<0.000000e+00> : vector<256x64xf32>
    %2 = tpu.matmul %0, %1, %cst {dimension_numbers = #tpu.dot_dimension_numbers<[1], [0], [0], [1], [0, 0, 1, 1], [], []>} : vector<256x147xbf16>, vector<147x64xbf16>, vector<256x64xf32> -> vector<256x64xf32>
    %c0_3 = arith.constant 0 : index
    %c0_4 = arith.constant 0 : index
    %3 = vector.load %arg4[%c0_3, %c0_4] : memref<1x64xf32, #tpu.memory_space<vmem>>, vector<1x64xf32>
    %4 = vector.broadcast %3 : vector<1x64xf32> to vector<256x64xf32>
    %5 = arith.addf %2, %4 : vector<256x64xf32>
    %cst_5 = arith.constant 0.000000e+00 : f32
    %6 = vector.broadcast %cst_5 : f32 to vector<256x64xf32>
    %7 = arith.maximumf %5, %6 : vector<256x64xf32>
    %8 = arith.truncf %7 : vector<256x64xf32> to vector<256x64xbf16>
    %c0_6 = arith.constant 0 : index
    %c0_7 = arith.constant 0 : index
    %9 = vector.load %arg5[%c0_6, %c0_7] : memref<256x64xbf16, #tpu.memory_space<vmem>>, vector<256x64xbf16>
    tpu.vector_store %arg5[%c0_6, %c0_7], %8 {strides = array<i32>} : memref<256x64xbf16, #tpu.memory_space<vmem>>, vector<256x64xbf16>,
    return
  }
  func.func @transform_0(%arg0: i32, %arg1: i32) -> (i32, i32) {
    %c0_i32 = arith.constant 0 : i32
    %c0_i32_0 = arith.constant 0 : i32
    return %arg0, %c0_i32 : i32, i32
  }
  func.func @transform_1(%arg0: i32, %arg1: i32) -> (i32, i32) {
    %c0_i32 = arith.constant 0 : i32
    %c0_i32_0 = arith.constant 0 : i32
    return %c0_i32, %arg1 : i32, i32
  }
  func.func @transform_2(%arg0: i32, %arg1: i32) -> (i32, i32) {
    %c0_i32 = arith.constant 0 : i32
    %c0_i32_0 = arith.constant 0 : i32
    return %c0_i32, %arg1 : i32, i32
  }
  func.func @transform_3(%arg0: i32, %arg1: i32) -> (i32, i32) {
    %c0_i32 = arith.constant 0 : i32
    return %arg0, %arg1 : i32, i32
  }
}

module attributes {stable_mosaic.version = 11 : i64} {
  func.func @_maxpool_kernel(%arg0: i32, %arg1: memref<1x9x9x64xbf16, #tpu.memory_space<vmem>>, %arg2: memref<1x9x9x64xbf16, #tpu.memory_space<vmem>>, %arg3: memref<1x9x9x64xbf16, #tpu.memory_space<vmem>>, %arg4: memref<1x9x9x64xbf16, #tpu.memory_space<vmem>>, %arg5: memref<1x8x8x64xbf16, #tpu.memory_space<vmem>>) attributes {dimension_semantics = [#tpu.dimension_semantics<parallel>], iteration_bounds = array<i64: 2>, scalar_prefetch = 0 : i64, scratch_operands = 0 : i64, tpu.core_type = #tpu.core_type<tc>, window_params = [{transform_indices = @transform_0, window_bounds = array<i64: 1, 9, 9, 64>}, {transform_indices = @transform_1, window_bounds = array<i64: 1, 9, 9, 64>}, {transform_indices = @transform_2, window_bounds = array<i64: 1, 9, 9, 64>}, {transform_indices = @transform_3, window_bounds = array<i64: 1, 9, 9, 64>}, {transform_indices = @transform_4, window_bounds = array<i64: 1, 8, 8, 64>}]} {
    %c0 = arith.constant 0 : index
    %c0_0 = arith.constant 0 : index
    %c0_1 = arith.constant 0 : index
    %c0_2 = arith.constant 0 : index
    %0 = vector.load %arg1[%c0, %c0_0, %c0_1, %c0_2] : memref<1x9x9x64xbf16, #tpu.memory_space<vmem>>, vector<1x9x9x64xbf16>
    %c0_3 = arith.constant 0 : index
    %c0_4 = arith.constant 0 : index
    %c0_5 = arith.constant 0 : index
    %c0_6 = arith.constant 0 : index
    %1 = vector.load %arg2[%c0_3, %c0_4, %c0_5, %c0_6] : memref<1x9x9x64xbf16, #tpu.memory_space<vmem>>, vector<1x9x9x64xbf16>
    %c0_7 = arith.constant 0 : index
    %c0_8 = arith.constant 0 : index
    %c0_9 = arith.constant 0 : index
    %c0_10 = arith.constant 0 : index
    %2 = vector.load %arg3[%c0_7, %c0_8, %c0_9, %c0_10] : memref<1x9x9x64xbf16, #tpu.memory_space<vmem>>, vector<1x9x9x64xbf16>
    %c0_11 = arith.constant 0 : index
    %c0_12 = arith.constant 0 : index
    %c0_13 = arith.constant 0 : index
    %c0_14 = arith.constant 0 : index
    %3 = vector.load %arg4[%c0_11, %c0_12, %c0_13, %c0_14] : memref<1x9x9x64xbf16, #tpu.memory_space<vmem>>, vector<1x9x9x64xbf16>
    %4 = vector.extract_strided_slice %0 {offsets = [0, 0, 0, 0], sizes = [1, 8, 8, 64], strides = [1, 1, 1, 1]} : vector<1x9x9x64xbf16> to vector<1x8x8x64xbf16>
    %5 = vector.extract_strided_slice %1 {offsets = [0, 0, 0, 0], sizes = [1, 8, 8, 64], strides = [1, 1, 1, 1]} : vector<1x9x9x64xbf16> to vector<1x8x8x64xbf16>
    %6 = vector.extract_strided_slice %0 {offsets = [0, 0, 1, 0], sizes = [1, 8, 8, 64], strides = [1, 1, 1, 1]} : vector<1x9x9x64xbf16> to vector<1x8x8x64xbf16>
    %7 = vector.extract_strided_slice %2 {offsets = [0, 0, 0, 0], sizes = [1, 8, 8, 64], strides = [1, 1, 1, 1]} : vector<1x9x9x64xbf16> to vector<1x8x8x64xbf16>
    %8 = vector.extract_strided_slice %3 {offsets = [0, 0, 0, 0], sizes = [1, 8, 8, 64], strides = [1, 1, 1, 1]} : vector<1x9x9x64xbf16> to vector<1x8x8x64xbf16>
    %9 = vector.extract_strided_slice %2 {offsets = [0, 0, 1, 0], sizes = [1, 8, 8, 64], strides = [1, 1, 1, 1]} : vector<1x9x9x64xbf16> to vector<1x8x8x64xbf16>
    %10 = vector.extract_strided_slice %0 {offsets = [0, 1, 0, 0], sizes = [1, 8, 8, 64], strides = [1, 1, 1, 1]} : vector<1x9x9x64xbf16> to vector<1x8x8x64xbf16>
    %11 = vector.extract_strided_slice %1 {offsets = [0, 1, 0, 0], sizes = [1, 8, 8, 64], strides = [1, 1, 1, 1]} : vector<1x9x9x64xbf16> to vector<1x8x8x64xbf16>
    %12 = vector.extract_strided_slice %0 {offsets = [0, 1, 1, 0], sizes = [1, 8, 8, 64], strides = [1, 1, 1, 1]} : vector<1x9x9x64xbf16> to vector<1x8x8x64xbf16>
    %13 = arith.maximumf %4, %5 : vector<1x8x8x64xbf16>
    %14 = arith.maximumf %13, %6 : vector<1x8x8x64xbf16>
    %15 = arith.maximumf %14, %7 : vector<1x8x8x64xbf16>
    %16 = arith.maximumf %15, %8 : vector<1x8x8x64xbf16>
    %17 = arith.maximumf %16, %9 : vector<1x8x8x64xbf16>
    %18 = arith.maximumf %17, %10 : vector<1x8x8x64xbf16>
    %19 = arith.maximumf %18, %11 : vector<1x8x8x64xbf16>
    %20 = arith.maximumf %19, %12 : vector<1x8x8x64xbf16>
    %c0_15 = arith.constant 0 : index
    %c0_16 = arith.constant 0 : index
    %c0_17 = arith.constant 0 : index
    %c0_18 = arith.constant 0 : index
    %21 = vector.load %arg5[%c0_15, %c0_16, %c0_17, %c0_18] : memref<1x8x8x64xbf16, #tpu.memory_space<vmem>>, vector<1x8x8x64xbf16>
    tpu.vector_store %arg5[%c0_15, %c0_16, %c0_17, %c0_18], %20 {strides = array<i32>} : memref<1x8x8x64xbf16, #tpu.memory_space<vmem>>, vector<1x8x8x64xbf16>,
    return
  }
  func.func @transform_0(%arg0: i32) -> (i32, i32, i32, i32) {
    %c0_i32 = arith.constant 0 : i32
    %c0_i32_0 = arith.constant 0 : i32
    %c0_i32_1 = arith.constant 0 : i32
    %c0_i32_2 = arith.constant 0 : i32
    return %arg0, %c0_i32, %c0_i32_0, %c0_i32_1 : i32, i32, i32, i32
  }
  func.func @transform_1(%arg0: i32) -> (i32, i32, i32, i32) {
    %c0_i32 = arith.constant 0 : i32
    %c0_i32_0 = arith.constant 0 : i32
    %c0_i32_1 = arith.constant 0 : i32
    %c0_i32_2 = arith.constant 0 : i32
    return %arg0, %c0_i32, %c0_i32_0, %c0_i32_1 : i32, i32, i32, i32
  }
  func.func @transform_2(%arg0: i32) -> (i32, i32, i32, i32) {
    %c0_i32 = arith.constant 0 : i32
    %c0_i32_0 = arith.constant 0 : i32
    %c0_i32_1 = arith.constant 0 : i32
    %c0_i32_2 = arith.constant 0 : i32
    return %arg0, %c0_i32, %c0_i32_0, %c0_i32_1 : i32, i32, i32, i32
  }
  func.func @transform_3(%arg0: i32) -> (i32, i32, i32, i32) {
    %c0_i32 = arith.constant 0 : i32
    %c0_i32_0 = arith.constant 0 : i32
    %c0_i32_1 = arith.constant 0 : i32
    %c0_i32_2 = arith.constant 0 : i32
    return %arg0, %c0_i32, %c0_i32_0, %c0_i32_1 : i32, i32, i32, i32
  }
  func.func @transform_4(%arg0: i32) -> (i32, i32, i32, i32) {
    %c0_i32 = arith.constant 0 : i32
    %c0_i32_0 = arith.constant 0 : i32
    %c0_i32_1 = arith.constant 0 : i32
    %c0_i32_2 = arith.constant 0 : i32
    return %arg0, %c0_i32, %c0_i32_0, %c0_i32_1 : i32, i32, i32, i32
  }
}

</mosaic_0001>

<llo_original>
// kernel: stem_fwd.2
$region0: #{stem_fwd.2}
  #allocation0 [shape = 'u32[]', space=smem, size = 0x4, offset = 0x4, fixed_abs, tag = 'smem constant byte address 0x4 - core index']
  #allocation1 [shape = 'u32[72,128]{1,0:T(1,128)}', space=vmem, size = 0x9000, scoped, tag = 'internal scratch']
  %s0 = inlined_call_operand.vmem [shape: bf16[512,147], index: 0, kind: input, shape index: {}]
  %s1 = inlined_call_operand.vmem [shape: bf16[147,64], index: 1, kind: input, shape index: {}]
  %s2 = inlined_call_operand.vmem [shape: f32[1,64], index: 2, kind: input, shape index: {}]
  %s3 = inlined_call_operand.vmem [shape: bf16[512,64], index: 3, kind: output, shape index: {}]
  %s4 = sld [smem:[#allocation0]]
  $region45: #{stem_fwd.2} parent=0
    _
  %s6 = ssub.s32 1, %s4
  %s7 = scalar_select 0, %s6, %s4
  loop: start=0, step=1, limit=4
  $region2: #{stem_fwd.2} parent=0 // loop_pre_header
    _
  $region3: #{stem_fwd.2} parent=0 // loop_header
    %s9 = sphi 0, %s13
    %p10 = scmp.ge.s32.totalorder %s9, 4
    %s16 = sphi 0, %s28
    %s17 = sphi 0, %s24
    %s18 = sphi 0, %s16
    %s19 = sphi 0, %s17
    %s20 = sphi 0, %s18
    %s21 = sphi 0, %s19
    %s31 = sphi 0, %s33
    %s34 = sphi 0, %s31
    %s35 = sphi 0, %s34
    %s51 = sphi 0, %s35
    %s57 = sphi 0, %s59
    %s60 = sphi 0, %s57
    %s61 = sphi 0, %s60
    %s77 = sphi 0, %s61
    %s83 = sphi 0, %s85
    %s86 = sphi 0, %s83
    %s87 = sphi 0, %s86
    %s103 = sphi 0, %s87
    %s111 = sphi 0, %s113
    %s114 = sphi 0, %s111
    %s115 = sphi 0, %s114
    %s131 = sphi 0, %s115
  $region4: #{stem_fwd.2} parent=0 // loop_header_branch
    %12 = sbr.rel (%p10) target = $region8
  $region5: #{stem_fwd.2} parent=0 // loop_body
    %s14 = ssub.s32 %s9, 1
    %s15 = ssub.s32 %s9, 2
    %s22 = sadd.s32 1, %s17
    %p23 = scmp.ge.s32.totalorder %s22, 1
    %s24 = scalar_select %p23, 0, %s22
    %s25 = sadd.s32 1, %s16
    %s26 = scalar_select %p23, %s25, %s16
    %p27 = scmp.ge.s32.totalorder %s26, 2
    %s28 = scalar_select %p27, 0, %s26
    %s29 = ssub.s32 %s16, %s28
    %p30 = scmp.eq.s32.totalorder %s29, 0
    %s32 = sadd.s32 %s31, 1
    %s33 = scalar_select %p30, %s31, %s32
    %p36 = pneg %p30
    %p37 = scmp.eq.s32.totalorder %s9, 1
    %p38 = por %p36, %p37
    %p39 = scmp.ne.s32.totalorder %s31, %s34
    %p40 = scmp.eq.s32.totalorder %s9, 0
    %p41 = por %p39, %p40
    %p42 = scmp.ne.s32.totalorder %s31, %s34
    %p43 = scmp.eq.s32.totalorder %s14, 1
    %p44 = por %p42, %p43
    %p45 = scmp.ne.s32.totalorder %s34, %s35
    %p46 = scmp.eq.s32.totalorder %s14, 0
    %p47 = por %p45, %p46
    %p48 = scmp.ne.s32.totalorder %s34, %s35
    %p49 = scmp.eq.s32.totalorder %s15, 1
    %p50 = por %p48, %p49
    %p52 = scmp.ne.s32.totalorder %s35, %s51
    %p53 = scmp.eq.s32.totalorder %s15, 0
    %p54 = por %p52, %p53
    %s55 = ssub.s32 %s17, %s24
    %p56 = scmp.eq.s32.totalorder %s55, 0
    %s58 = sadd.s32 %s57, 1
    %s59 = scalar_select %p56, %s57, %s58
    %p62 = pneg %p56
    %p63 = scmp.eq.s32.totalorder %s9, 1
    %p64 = por %p62, %p63
    %p65 = scmp.ne.s32.totalorder %s57, %s60
    %p66 = scmp.eq.s32.totalorder %s9, 0
    %p67 = por %p65, %p66
    %p68 = scmp.ne.s32.totalorder %s57, %s60
    %p69 = scmp.eq.s32.totalorder %s14, 1
    %p70 = por %p68, %p69
    %p71 = scmp.ne.s32.totalorder %s60, %s61
    %p72 = scmp.eq.s32.totalorder %s14, 0
    %p73 = por %p71, %p72
    %p74 = scmp.ne.s32.totalorder %s60, %s61
    %p75 = scmp.eq.s32.totalorder %s15, 1
    %p76 = por %p74, %p75
    %p78 = scmp.ne.s32.totalorder %s61, %s77
    %p79 = scmp.eq.s32.totalorder %s15, 0
    %p80 = por %p78, %p79
    %s81 = ssub.s32 %s17, %s24
    %p82 = scmp.eq.s32.totalorder %s81, 0
    %s84 = sadd.s32 %s83, 1
    %s85 = scalar_select %p82, %s83, %s84
    %p88 = pneg %p82
    %p89 = scmp.eq.s32.totalorder %s9, 1
    %p90 = por %p88, %p89
    %p91 = scmp.ne.s32.totalorder %s83, %s86
    %p92 = scmp.eq.s32.totalorder %s9, 0
    %p93 = por %p91, %p92
    %p94 = scmp.ne.s32.totalorder %s83, %s86
    %p95 = scmp.eq.s32.totalorder %s14, 1
    %p96 = por %p94, %p95
    %p97 = scmp.ne.s32.totalorder %s86, %s87
    %p98 = scmp.eq.s32.totalorder %s14, 0
    %p99 = por %p97, %p98
    %p100 = scmp.ne.s32.totalorder %s86, %s87
    %p101 = scmp.eq.s32.totalorder %s15, 1
    %p102 = por %p100, %p101
    %p104 = scmp.ne.s32.totalorder %s87, %s103
    %p105 = scmp.eq.s32.totalorder %s15, 0
    %p106 = por %p104, %p105
    %s107 = ssub.s32 %s16, %s28
    %s108 = ssub.s32 %s17, %s24
    %s109 = sor.u32 %s107, %s108
    %p110 = scmp.eq.s32.totalorder %s109, 0
    %s112 = sadd.s32 %s111, 1
    %s113 = scalar_select %p110, %s111, %s112
    %p116 = pneg %p110
    %p117 = scmp.eq.s32.totalorder %s9, 1
    %p118 = por %p116, %p117
    %p119 = scmp.ne.s32.totalorder %s111, %s114
    %p120 = scmp.eq.s32.totalorder %s9, 0
    %p121 = por %p119, %p120
    %p122 = scmp.ne.s32.totalorder %s111, %s114
    %p123 = scmp.eq.s32.totalorder %s14, 1
    %p124 = por %p122, %p123
    %p125 = scmp.ne.s32.totalorder %s114, %s115
    %p126 = scmp.eq.s32.totalorder %s14, 0
    %p127 = por %p125, %p126
    %p128 = scmp.ne.s32.totalorder %s114, %s115
    %p129 = scmp.eq.s32.totalorder %s15, 1
    %p130 = por %p128, %p129
    %p132 = scmp.ne.s32.totalorder %s115, %s131
    %p133 = scmp.eq.s32.totalorder %s15, 0
    %p134 = por %p132, %p133
    %p135 = scmp.le.s32.totalorder 1, %s9
    %p136 = scmp.lt.s32.totalorder %s9, 3
    %p137 = pnand %p135, %p136
    %p138 = pneg %p137
    // Predicated region
    $region9: #{stem_fwd.2} parent=5 // pred_check
      _
    $region10: #{stem_fwd.2} parent=5 // pred_check_branch
      %140 = sbr.rel (%p137) target = $region12
    $region11: #{stem_fwd.2} parent=5 // pred_region
      %s141 = ssub.s32 %s9, 1
      // Predicated region
      $region13: #{stem_fwd.2} parent=11 // pred_check
        %p142 = pneg %p73
      $region14: #{stem_fwd.2} parent=11 // pred_check_branch
        %144 = sbr.rel (%p142) target = $region16
      $region15: #{stem_fwd.2} parent=11 // pred_region
        %p145 = scmp.lt.s32.totalorder %s19, 0
        %s146 = scalar_select %p145, %s19, 0
        %s147 = smul.addr %s146, 4
        %s148 = scalar_lea.vmem %s1, %s147
      $region16: #{stem_fwd.2} parent=11 // pred_fallthru
        _
      // Predicated region
      $region17: #{stem_fwd.2} parent=11 // pred_check
        %p149 = pneg %p99
      $region18: #{stem_fwd.2} parent=11 // pred_check_branch
        %151 = sbr.rel (%p149) target = $region20
      $region19: #{stem_fwd.2} parent=11 // pred_region
        %p152 = scmp.lt.s32.totalorder %s19, 0
        %s153 = scalar_select %p152, %s19, 0
        %s154 = scalar_lea.vmem %s2, %s153
      $region20: #{stem_fwd.2} parent=11 // pred_fallthru
        _
    $region12: #{stem_fwd.2} parent=5 // pred_fallthru
      _
    %p155 = scmp.lt.s32.totalorder %s9, 2
    // Predicated region
    $region21: #{stem_fwd.2} parent=5 // pred_check
      %p156 = pneg %p155
    $region22: #{stem_fwd.2} parent=5 // pred_check_branch
      %158 = sbr.rel (%p156) target = $region24
    $region23: #{stem_fwd.2} parent=5 // pred_region
      // Predicated region
      $region25: #{stem_fwd.2} parent=23 // pred_check
        %p159 = pneg %p41
      $region26: #{stem_fwd.2} parent=23 // pred_check_branch
        %161 = sbr.rel (%p159) target = $region28
      $region27: #{stem_fwd.2} parent=23 // pred_region
        %s162 = smul.u32 32, %s16
        %p163 = scmp.lt.s32.totalorder %s162, 63
        %s164 = scalar_select %p163, %s162, 63
        %s165 = smul.addr %s164, 2
        %s166 = smul.addr %s165, 4
        %s167 = scalar_lea.vmem %s0, %s166
        %s168 = smul.u32 32, %s16
      $region28: #{stem_fwd.2} parent=23 // pred_fallthru
        _
    $region24: #{stem_fwd.2} parent=5 // pred_fallthru
      _
    %p169 = scmp.le.s32.totalorder 1, %s9
    %p170 = scmp.lt.s32.totalorder %s9, 3
    %p171 = pnand %p169, %p170
    %p172 = pneg %p171
    // Predicated region
    $region29: #{stem_fwd.2} parent=5 // pred_check
      _
    $region30: #{stem_fwd.2} parent=5 // pred_check_branch
      %174 = sbr.rel (%p171) target = $region32
    $region31: #{stem_fwd.2} parent=5 // pred_region
      %s175 = ssub.s32 %s9, 1
      %s176 = smul.u32 32, %s18
      %p177 = scmp.lt.s32.totalorder %s176, 63
      %s178 = scalar_select %p177, %s176, 63
      %s179 = smul.addr %s178, 2
      %s180 = smul.addr %s179, 4
      %s181 = scalar_lea.vmem %s0, %s180
      %p182 = pneg %p47
      %p183 = pneg %p44
      %p184 = scmp.lt.s32.totalorder %s19, 0
      %s185 = scalar_select %p184, %s19, 0
      %s186 = smul.addr %s185, 4
      %s187 = scalar_lea.vmem %s1, %s186
      %p188 = pneg %p73
      %p189 = pneg %p70
      %p190 = scmp.lt.s32.totalorder %s19, 0
      %s191 = scalar_select %p190, %s19, 0
      %s192 = scalar_lea.vmem %s2, %s191
      %p193 = pneg %p99
      %p194 = pneg %p96
      %p195 = pneg %p127
      %p196 = pneg %p124
      %s197 = smul.u32 32, %s18
      %p198 = scmp.lt.s32.totalorder %s197, 63
      %s199 = scalar_select %p198, %s197, 63
      %p200 = scmp.lt.s32.totalorder %s19, 0
      %s201 = scalar_select %p200, %s19, 0
      %s202 = sadd.s32 %s201, %s199
      %s203 = smul.addr %s202, 4
      %s204 = scalar_lea.vmem %s3, %s203
      %s205 = smul.u32 32, %s18
      %p206 = scmp.lt.s32.totalorder %s205, 63
      %s207 = scalar_select %p206, %s205, 63
      %s208 = smul.addr %s207, 2
      %s209 = smul.addr %s208, 4
      %s210 = scalar_lea.vmem %s0, %s209
      %s211 = smul.u32 32, %s18
      %p212 = scmp.lt.s32.totalorder %s19, 0
      %s213 = scalar_select %p212, %s19, 0
      %s214 = smul.addr %s213, 4
      %s215 = scalar_lea.vmem %s1, %s214
      %p216 = scmp.lt.s32.totalorder %s19, 0
      %s217 = scalar_select %p216, %s19, 0
      %s218 = scalar_lea.vmem %s2, %s217
      %s219 = smul.u32 32, %s18
      %p220 = scmp.lt.s32.totalorder %s219, 63
      %s221 = scalar_select %p220, %s219, 63
      %p222 = scmp.lt.s32.totalorder %s19, 0
      %s223 = scalar_select %p222, %s19, 0
      %s224 = sadd.s32 %s223, %s221
      %s225 = smul.addr %s224, 4
      %s226 = scalar_lea.vmem %s3, %s225
      %s227 = smul.u32 32, %s18
      %v229 = vld [vmem:[%s210] sm:$0xff]
      %v230 = vld [vmem:[%s210 + $0x8] sm:$0xff]
      %v231 = vld [vmem:[%s210 + $0x10] sm:$0xff]
      %v232 = vld [vmem:[%s210 + $0x18] sm:$0xff]
      %v233 = vld [vmem:[%s210 + $0x20] sm:$0xff]
      %v234 = vld [vmem:[%s210 + $0x28] sm:$0xff]
      %v235 = vld [vmem:[%s210 + $0x30] sm:$0xff]
      %v236 = vld [vmem:[%s210 + $0x38] sm:$0xff]
      %v237 = vld [vmem:[%s210 + $0x40] sm:$0xff]
      %v238 = vld [vmem:[%s210 + $0x48] sm:$0xff]
      %v239 = vld [vmem:[%s210 + $0x50] sm:$0xff]
      %v240 = vld [vmem:[%s210 + $0x58] sm:$0xff]
      %v241 = vld [vmem:[%s210 + $0x60] sm:$0xff]
      %v242 = vld [vmem:[%s210 + $0x68] sm:$0xff]
      %v243 = vld [vmem:[%s210 + $0x70] sm:$0xff]
      %v244 = vld [vmem:[%s210 + $0x78] sm:$0xff]
      %v245 = vld [vmem:[%s210 + $0x80] sm:$0xff]
      %v246 = vld [vmem:[%s210 + $0x88] sm:$0xff]
      %v247 = vld [vmem:[%s210 + $0x90] sm:$0xff]
      %v248 = vld [vmem:[%s210 + $0x98] sm:$0xff]
      %v249 = vld [vmem:[%s210 + $0xa0] sm:$0xff]
      %v250 = vld [vmem:[%s210 + $0xa8] sm:$0xff]
      %v251 = vld [vmem:[%s210 + $0xb0] sm:$0xff]
      %v252 = vld [vmem:[%s210 + $0xb8] sm:$0xff]
      %v253 = vld [vmem:[%s210 + $0xc0] sm:$0xff]
      %v254 = vld [vmem:[%s210 + $0xc8] sm:$0xff]
      %v255 = vld [vmem:[%s210 + $0xd0] sm:$0xff]
      %v256 = vld [vmem:[%s210 + $0xd8] sm:$0xff]
      %v257 = vld [vmem:[%s210 + $0xe0] sm:$0xff]
      %v258 = vld [vmem:[%s210 + $0xe8] sm:$0xff]
      %v259 = vld [vmem:[%s210 + $0xf0] sm:$0xff]
      %v260 = vld [vmem:[%s210 + $0xf8] sm:$0xff]
      %v261 = vld [vmem:[%s215] sm:$0xf]
      %v262 = vld [vmem:[%s215 + $0x4] sm:$0xf]
      %v263 = vld [vmem:[%s215 + $0x8] sm:$0xf]
      %v264 = vld [vmem:[%s215 + $0xc] sm:$0xf]
      %v265 = vld [vmem:[%s215 + $0x10] sm:$0xf]
      %v266 = vld [vmem:[%s215 + $0x14] sm:$0xf]
      %v267 = vld [vmem:[%s215 + $0x18] sm:$0xf]
      %v268 = vld [vmem:[%s215 + $0x1c] sm:$0xf]
      %v269 = vld [vmem:[%s215 + $0x20] sm:$0xf]
      %v270 = vld [vmem:[%s215 + $0x24] sm:$0xf]
      %v271 = vld [vmem:[%s215 + $0x28] sm:$0xf]
      %v272 = vld [vmem:[%s215 + $0x2c] sm:$0xf]
      %v273 = vld [vmem:[%s215 + $0x30] sm:$0xf]
      %v274 = vld [vmem:[%s215 + $0x34] sm:$0xf]
      %v275 = vld [vmem:[%s215 + $0x38] sm:$0xf]
      %v276 = vld [vmem:[%s215 + $0x3c] sm:$0xf]
      %v277 = vld [vmem:[%s215 + $0x40] sm:$0xf]
      %v278 = vld [vmem:[%s215 + $0x44] sm:$0xf]
      %v279 = vld [vmem:[%s215 + $0x48] sm:$0x3]
      %v280 = vld [vmem:[%s218] sm:$0x1]
      %v282 = vperm.slane %v280, 0
      %v316 = vunpack.c.l.b16 %v229
      %v317 = vunpack.c.h.b16 %v229
      %v318 = vunpack.c.l.b16 %v230
      %v319 = vunpack.c.h.b16 %v230
      %v320 = vunpack.c.l.b16 %v231
      %v321 = vunpack.c.h.b16 %v231
      %v322 = vunpack.c.l.b16 %v232
      %v323 = vunpack.c.h.b16 %v232
      %v324 = vunpack.c.l.b16 %v233
      %v325 = vunpack.c.h.b16 %v233
      %v326 = vunpack.c.l.b16 %v234
      %v327 = vunpack.c.h.b16 %v234
      %v328 = vunpack.c.l.b16 %v235
      %v329 = vunpack.c.h.b16 %v235
      %v330 = vunpack.c.l.b16 %v236
      %v331 = vunpack.c.h.b16 %v236
      %v332 = vunpack.c.l.b16 %v237
      %v333 = vunpack.c.h.b16 %v237
      %v334 = vunpack.c.l.b16 %v238
      %v335 = vunpack.c.h.b16 %v238
      %v336 = vunpack.c.l.b16 %v239
      %v337 = vunpack.c.h.b16 %v239
      %v338 = vunpack.c.l.b16 %v240
      %v339 = vunpack.c.h.b16 %v240
      %v340 = vunpack.c.l.b16 %v241
      %v341 = vunpack.c.h.b16 %v241
      %v342 = vunpack.c.l.b16 %v242
      %v343 = vunpack.c.h.b16 %v242
      %v344 = vunpack.c.l.b16 %v243
      %v345 = vunpack.c.h.b16 %v243
      %v346 = vunpack.c.l.b16 %v244
      %v347 = vunpack.c.h.b16 %v244
      %v348 = vunpack.c.l.b16 %v245
      %v349 = vunpack.c.h.b16 %v245
      %v350 = vunpack.c.l.b16 %v246
      %v351 = vunpack.c.h.b16 %v246
      %v352 = vunpack.c.l.b16 %v247
      %v353 = vunpack.c.h.b16 %v247
      %v354 = vunpack.c.l.b16 %v248
      %v355 = vunpack.c.h.b16 %v248
      %v356 = vunpack.c.l.b16 %v249
      %v357 = vunpack.c.h.b16 %v249
      %v358 = vunpack.c.l.b16 %v250
      %v359 = vunpack.c.h.b16 %v250
      %v360 = vunpack.c.l.b16 %v251
      %v361 = vunpack.c.h.b16 %v251
      %v362 = vunpack.c.l.b16 %v252
      %v363 = vunpack.c.h.b16 %v252
      %v364 = vunpack.c.l.b16 %v253
      %v365 = vunpack.c.h.b16 %v253
      %v366 = vunpack.c.l.b16 %v254
      %v367 = vunpack.c.h.b16 %v254
      %v368 = vunpack.c.l.b16 %v255
      %v369 = vunpack.c.h.b16 %v255
      %v370 = vunpack.c.l.b16 %v256
      %v371 = vunpack.c.h.b16 %v256
      %v372 = vunpack.c.l.b16 %v257
      %v373 = vunpack.c.h.b16 %v257
      %v374 = vunpack.c.l.b16 %v258
      %v375 = vunpack.c.h.b16 %v258
      %v376 = vunpack.c.l.b16 %v259
      %v377 = vunpack.c.h.b16 %v259
      %v378 = vunpack.c.l.b16 %v260
      %v379 = vunpack.c.h.b16 %v260
      %v380 = vpack.c.b16 %v318, %v316
      %v381 = vpack.c.b16 %v319, %v317
      %v382 = vpack.c.b16 %v322, %v320
      %v383 = vpack.c.b16 %v323, %v321
      %v384 = vpack.c.b16 %v326, %v324
      %v385 = vpack.c.b16 %v327, %v325
      %v386 = vpack.c.b16 %v330, %v328
      %v387 = vpack.c.b16 %v331, %v329
      %v388 = vpack.c.b16 %v334, %v332
      %v389 = vpack.c.b16 %v335, %v333
      %v390 = vpack.c.b16 %v338, %v336
      %v391 = vpack.c.b16 %v339, %v337
      %v392 = vpack.c.b16 %v342, %v340
      %v393 = vpack.c.b16 %v343, %v341
      %v394 = vpack.c.b16 %v346, %v344
      %v395 = vpack.c.b16 %v347, %v345
      %v396 = vpack.c.b16 %v350, %v348
      %v397 = vpack.c.b16 %v351, %v349
      %v398 = vpack.c.b16 %v354, %v352
      %v399 = vpack.c.b16 %v355, %v353
      %v400 = vpack.c.b16 %v358, %v356
      %v401 = vpack.c.b16 %v359, %v357
      %v402 = vpack.c.b16 %v362, %v360
      %v403 = vpack.c.b16 %v363, %v361
      %v404 = vpack.c.b16 %v366, %v364
      %v405 = vpack.c.b16 %v367, %v365
      %v406 = vpack.c.b16 %v370, %v368
      %v407 = vpack.c.b16 %v371, %v369
      %v408 = vpack.c.b16 %v374, %v372
      %v409 = vpack.c.b16 %v375, %v373
      %v410 = vpack.c.b16 %v378, %v376
      %v411 = vpack.c.b16 %v379, %v377
      %v447 = vunpack.c.l.b16 %v261
      %v448 = vunpack.c.l.b16 %v262
      %v449 = vunpack.c.l.b16 %v263
      %v450 = vunpack.c.l.b16 %v264
      %v451 = vunpack.c.l.b16 %v265
      %v452 = vunpack.c.l.b16 %v266
      %v453 = vunpack.c.l.b16 %v267
      %v454 = vunpack.c.l.b16 %v268
      %v455 = vunpack.c.l.b16 %v269
      %v456 = vunpack.c.l.b16 %v270
      %v457 = vunpack.c.l.b16 %v271
      %v458 = vunpack.c.l.b16 %v272
      %v459 = vunpack.c.l.b16 %v273
      %v460 = vunpack.c.l.b16 %v274
      %v461 = vunpack.c.l.b16 %v275
      %v462 = vunpack.c.l.b16 %v276
      %v463 = vunpack.c.l.b16 %v277
      %v464 = vunpack.c.l.b16 %v278
      %v465 = vunpack.c.l.b16 %v279
      %v466 = vpack.c.b16 %v448, %v447
      %v467 = vpack.c.b16 %v450, %v449
      %v468 = vpack.c.b16 %v452, %v451
      %v469 = vpack.c.b16 %v454, %v453
      %v470 = vpack.c.b16 %v456, %v455
      %v471 = vpack.c.b16 %v458, %v457
      %v472 = vpack.c.b16 %v460, %v459
      %v473 = vpack.c.b16 %v462, %v461
      %v474 = vpack.c.b16 %v464, %v463
      %v475 = vpack.c.b16 %v465, %v465
      %vm485 = vcmask 154624
      %v487 = vsel %vm485, %v381, 0
      %v490 = vsel %vm485, %v383, 0
      %v493 = vsel %vm485, %v385, 0
      %v496 = vsel %vm485, %v387, 0
      %v499 = vsel %vm485, %v389, 0
      %v502 = vsel %vm485, %v391, 0
      %v505 = vsel %vm485, %v393, 0
      %v508 = vsel %vm485, %v395, 0
      %v511 = vsel %vm485, %v397, 0
      %v514 = vsel %vm485, %v399, 0
      %v517 = vsel %vm485, %v401, 0
      %v520 = vsel %vm485, %v403, 0
      %v523 = vsel %vm485, %v405, 0
      %v526 = vsel %vm485, %v407, 0
      %v529 = vsel %vm485, %v409, 0
      %v532 = vsel %vm485, %v411, 0
      %vm534 = vcmask 1040384
      %vm535 = vcmask 1041408
      %v536 = vsel %vm534, 4294967295, 65535
      %v537 = vsel %vm535, %v536, 0
      %v539 = vand.u32 %v475, %v537
      %541 = vmatpush.bf16.msra.mxu0 %v473
      %542 = vmatpush.bf16.msra.mxu0 %v472
      %543 = vmatpush.bf16.msra.mxu0 %v471
      %544 = vmatpush.bf16.msra.mxu0 %v470
      %545 = vmatpush.bf16.msra.mxu0 %v469
      %546 = vmatpush.bf16.msra.mxu0 %v468
      %547 = vmatpush.bf16.msra.mxu0 %v467
      %548 = vmatpush.bf16.msra.mxu0 %v466
      %549 = vmatmul.bf16.gmra.mxu0 %v380
      %v550 = vpop.f32.mrf.mxu0
      %v551 = vadd.f32 %v282, %v550
      %v552 = vpop.f32.mrf.mxu0
      %v553 = vadd.f32 %v282, %v552
      %554 = vmatmul.bf16.gmra.mxu0 %v382
      %v555 = vpop.f32.mrf.mxu0
      %v556 = vadd.f32 %v282, %v555
      %v557 = vpop.f32.mrf.mxu0
      %v558 = vadd.f32 %v282, %v557
      %559 = vmatmul.bf16.gmra.mxu0 %v384
      %v560 = vpop.f32.mrf.mxu0
      %v561 = vadd.f32 %v282, %v560
      %v562 = vpop.f32.mrf.mxu0
      %v563 = vadd.f32 %v282, %v562
      %564 = vmatmul.bf16.gmra.mxu0 %v386
      %v565 = vpop.f32.mrf.mxu0
      %v566 = vadd.f32 %v282, %v565
      %v567 = vpop.f32.mrf.mxu0
      %v568 = vadd.f32 %v282, %v567
      %569 = vmatmul.bf16.gmra.mxu0 %v388
      %v570 = vpop.f32.mrf.mxu0
      %v571 = vadd.f32 %v282, %v570
      %v572 = vpop.f32.mrf.mxu0
      %v573 = vadd.f32 %v282, %v572
      %574 = vmatmul.bf16.gmra.mxu0 %v390
      %v575 = vpop.f32.mrf.mxu0
      %v576 = vadd.f32 %v282, %v575
      %v577 = vpop.f32.mrf.mxu0
      %v578 = vadd.f32 %v282, %v577
      %579 = vmatmul.bf16.gmra.mxu0 %v392
      %v580 = vpop.f32.mrf.mxu0
      %v581 = vadd.f32 %v282, %v580
      %v582 = vpop.f32.mrf.mxu0
      %v583 = vadd.f32 %v282, %v582
      %584 = vmatmul.bf16.gmra.mxu0 %v394
      %v585 = vpop.f32.mrf.mxu0
      %v586 = vadd.f32 %v282, %v585
      %v587 = vpop.f32.mrf.mxu0
      %v588 = vadd.f32 %v282, %v587
      %589 = vmatmul.bf16.gmra.mxu0 %v396
      %v590 = vpop.f32.mrf.mxu0
      %v591 = vadd.f32 %v282, %v590
      %v592 = vpop.f32.mrf.mxu0
      %v593 = vadd.f32 %v282, %v592
      %594 = vmatmul.bf16.gmra.mxu0 %v398
      %v595 = vpop.f32.mrf.mxu0
      %v596 = vadd.f32 %v282, %v595
      %v597 = vpop.f32.mrf.mxu0
      %v598 = vadd.f32 %v282, %v597
      %599 = vmatmul.bf16.gmra.mxu0 %v400
      %v600 = vpop.f32.mrf.mxu0
      %v601 = vadd.f32 %v282, %v600
      %v602 = vpop.f32.mrf.mxu0
      %v603 = vadd.f32 %v282, %v602
      %604 = vmatmul.bf16.gmra.mxu0 %v402
      %v605 = vpop.f32.mrf.mxu0
      %v606 = vadd.f32 %v282, %v605
      %v607 = vpop.f32.mrf.mxu0
      %v608 = vadd.f32 %v282, %v607
      %609 = vmatmul.bf16.gmra.mxu0 %v404
      %v610 = vpop.f32.mrf.mxu0
      %v611 = vadd.f32 %v282, %v610
      %v612 = vpop.f32.mrf.mxu0
      %v613 = vadd.f32 %v282, %v612
      %614 = vmatmul.bf16.gmra.mxu0 %v406
      %v615 = vpop.f32.mrf.mxu0
      %v616 = vadd.f32 %v282, %v615
      %v617 = vpop.f32.mrf.mxu0
      %v618 = vadd.f32 %v282, %v617
      %619 = vmatmul.bf16.gmra.mxu0 %v408
      %v620 = vpop.f32.mrf.mxu0
      %v621 = vadd.f32 %v282, %v620
      %v622 = vpop.f32.mrf.mxu0
      %v623 = vadd.f32 %v282, %v622
      %624 = vmatmul.bf16.gmra.mxu0 %v410
      %v625 = vpop.f32.mrf.mxu0
      %v626 = vadd.f32 %v282, %v625
      %v627 = vpop.f32.mrf.mxu0
      %v628 = vadd.f32 %v282, %v627
      %629 = vdwg.mxu0
      %630 = vmatpush.bf16.msra.mxu0 0
      %631 = vmatpush.bf16.msra.mxu0 0
      %632 = vmatpush.bf16.msra.mxu0 0
      %633 = vmatpush.bf16.msra.mxu0 0
      %634 = vmatpush.bf16.msra.mxu0 0
      %635 = vmatpush.bf16.msra.mxu0 0
      %636 = vmatpush.bf16.msra.mxu0 %v539
      %637 = vmatpush.bf16.msra.mxu0 %v474
      %638 = vmatmul.bf16.gmra.mxu0 %v487
      %v639 = vpop.f32.mrf.mxu0
      %v640 = vadd.f32 %v551, %v639
      %v641 = vpop.f32.mrf.mxu0
      %v642 = vadd.f32 %v553, %v641
      %643 = vmatmul.bf16.gmra.mxu0 %v490
      %v644 = vpop.f32.mrf.mxu0
      %v645 = vadd.f32 %v556, %v644
      %v646 = vpop.f32.mrf.mxu0
      %v647 = vadd.f32 %v558, %v646
      %648 = vmatmul.bf16.gmra.mxu0 %v493
      %v649 = vpop.f32.mrf.mxu0
      %v650 = vadd.f32 %v561, %v649
      %v651 = vpop.f32.mrf.mxu0
      %v652 = vadd.f32 %v563, %v651
      %653 = vmatmul.bf16.gmra.mxu0 %v496
      %v654 = vpop.f32.mrf.mxu0
      %v655 = vadd.f32 %v566, %v654
      %v656 = vpop.f32.mrf.mxu0
      %v657 = vadd.f32 %v568, %v656
      %658 = vmatmul.bf16.gmra.mxu0 %v499
      %v659 = vpop.f32.mrf.mxu0
      %v660 = vadd.f32 %v571, %v659
      %v661 = vpop.f32.mrf.mxu0
      %v662 = vadd.f32 %v573, %v661
      %663 = vmatmul.bf16.gmra.mxu0 %v502
      %v664 = vpop.f32.mrf.mxu0
      %v665 = vadd.f32 %v576, %v664
      %v666 = vpop.f32.mrf.mxu0
      %v667 = vadd.f32 %v578, %v666
      %668 = vmatmul.bf16.gmra.mxu0 %v505
      %v669 = vpop.f32.mrf.mxu0
      %v670 = vadd.f32 %v581, %v669
      %v671 = vpop.f32.mrf.mxu0
      %v672 = vadd.f32 %v583, %v671
      %673 = vmatmul.bf16.gmra.mxu0 %v508
      %v674 = vpop.f32.mrf.mxu0
      %v675 = vadd.f32 %v586, %v674
      %v676 = vpop.f32.mrf.mxu0
      %v677 = vadd.f32 %v588, %v676
      %678 = vmatmul.bf16.gmra.mxu0 %v511
      %v679 = vpop.f32.mrf.mxu0
      %v680 = vadd.f32 %v591, %v679
      %v681 = vpop.f32.mrf.mxu0
      %v682 = vadd.f32 %v593, %v681
      %683 = vmatmul.bf16.gmra.mxu0 %v514
      %v684 = vpop.f32.mrf.mxu0
      %v685 = vadd.f32 %v596, %v684
      %v686 = vpop.f32.mrf.mxu0
      %v687 = vadd.f32 %v598, %v686
      %688 = vmatmul.bf16.gmra.mxu0 %v517
      %v689 = vpop.f32.mrf.mxu0
      %v690 = vadd.f32 %v601, %v689
      %v691 = vpop.f32.mrf.mxu0
      %v692 = vadd.f32 %v603, %v691
      %693 = vmatmul.bf16.gmra.mxu0 %v520
      %v694 = vpop.f32.mrf.mxu0
      %v695 = vadd.f32 %v606, %v694
      %v696 = vpop.f32.mrf.mxu0
      %v697 = vadd.f32 %v608, %v696
      %698 = vmatmul.bf16.gmra.mxu0 %v523
      %v699 = vpop.f32.mrf.mxu0
      %v700 = vadd.f32 %v611, %v699
      %v701 = vpop.f32.mrf.mxu0
      %v702 = vadd.f32 %v613, %v701
      %703 = vmatmul.bf16.gmra.mxu0 %v526
      %v704 = vpop.f32.mrf.mxu0
      %v705 = vadd.f32 %v616, %v704
      %v706 = vpop.f32.mrf.mxu0
      %v707 = vadd.f32 %v618, %v706
      %708 = vmatmul.bf16.gmra.mxu0 %v529
      %v709 = vpop.f32.mrf.mxu0
      %v710 = vadd.f32 %v621, %v709
      %v711 = vpop.f32.mrf.mxu0
      %v712 = vadd.f32 %v623, %v711
      %713 = vmatmul.bf16.gmra.mxu0 %v532
      %v714 = vpop.f32.mrf.mxu0
      %v715 = vadd.f32 %v626, %v714
      %v716 = vpop.f32.mrf.mxu0
      %v717 = vadd.f32 %v628, %v716
      %718 = vdwg.mxu0
      %v719 = vmax.f32 %v640, 0.0
      %v720 = vmax.f32 %v642, 0.0
      %v721 = vmax.f32 %v645, 0.0
      %v722 = vmax.f32 %v647, 0.0
      %v723 = vmax.f32 %v650, 0.0
      %v724 = vmax.f32 %v652, 0.0
      %v725 = vmax.f32 %v655, 0.0
      %v726 = vmax.f32 %v657, 0.0
      %v727 = vmax.f32 %v660, 0.0
      %v728 = vmax.f32 %v662, 0.0
      %v729 = vmax.f32 %v665, 0.0
      %v730 = vmax.f32 %v667, 0.0
      %v731 = vmax.f32 %v670, 0.0
      %v732 = vmax.f32 %v672, 0.0
      %v733 = vmax.f32 %v675, 0.0
      %v734 = vmax.f32 %v677, 0.0
      %v735 = vmax.f32 %v680, 0.0
      %v736 = vmax.f32 %v682, 0.0
      %v737 = vmax.f32 %v685, 0.0
      %v738 = vmax.f32 %v687, 0.0
      %v739 = vmax.f32 %v690, 0.0
      %v740 = vmax.f32 %v692, 0.0
      %v741 = vmax.f32 %v695, 0.0
      %v742 = vmax.f32 %v697, 0.0
      %v743 = vmax.f32 %v700, 0.0
      %v744 = vmax.f32 %v702, 0.0
      %v745 = vmax.f32 %v705, 0.0
      %v746 = vmax.f32 %v707, 0.0
      %v747 = vmax.f32 %v710, 0.0
      %v748 = vmax.f32 %v712, 0.0
      %v749 = vmax.f32 %v715, 0.0
      %v750 = vmax.f32 %v717, 0.0
      %v751 = vpack.c.bf16 %v719, %v719
      %v752 = vpack.c.bf16 %v720, %v720
      %v753 = vpack.c.bf16 %v721, %v721
      %v754 = vpack.c.bf16 %v722, %v722
      %v755 = vpack.c.bf16 %v723, %v723
      %v756 = vpack.c.bf16 %v724, %v724
      %v757 = vpack.c.bf16 %v725, %v725
      %v758 = vpack.c.bf16 %v726, %v726
      %v759 = vpack.c.bf16 %v727, %v727
      %v760 = vpack.c.bf16 %v728, %v728
      %v761 = vpack.c.bf16 %v729, %v729
      %v762 = vpack.c.bf16 %v730, %v730
      %v763 = vpack.c.bf16 %v731, %v731
      %v764 = vpack.c.bf16 %v732, %v732
      %v765 = vpack.c.bf16 %v733, %v733
      %v766 = vpack.c.bf16 %v734, %v734
      %v767 = vpack.c.bf16 %v735, %v735
      %v768 = vpack.c.bf16 %v736, %v736
      %v769 = vpack.c.bf16 %v737, %v737
      %v770 = vpack.c.bf16 %v738, %v738
      %v771 = vpack.c.bf16 %v739, %v739
      %v772 = vpack.c.bf16 %v740, %v740
      %v773 = vpack.c.bf16 %v741, %v741
      %v774 = vpack.c.bf16 %v742, %v742
      %v775 = vpack.c.bf16 %v743, %v743
      %v776 = vpack.c.bf16 %v744, %v744
      %v777 = vpack.c.bf16 %v745, %v745
      %v778 = vpack.c.bf16 %v746, %v746
      %v779 = vpack.c.bf16 %v747, %v747
      %v780 = vpack.c.bf16 %v748, %v748
      %v781 = vpack.c.bf16 %v749, %v749
      %v782 = vpack.c.bf16 %v750, %v750
      %vm783 = vcmask 519168
      %784 = vst.msk [vmem:[%s226] sm:$0xf] %vm783, %v751
      %785 = vst.msk [vmem:[%s226 + $0x4] sm:$0xf] %vm783, %v752
      %786 = vst.msk [vmem:[%s226 + $0x8] sm:$0xf] %vm783, %v753
      %787 = vst.msk [vmem:[%s226 + $0xc] sm:$0xf] %vm783, %v754
      %788 = vst.msk [vmem:[%s226 + $0x10] sm:$0xf] %vm783, %v755
      %789 = vst.msk [vmem:[%s226 + $0x14] sm:$0xf] %vm783, %v756
      %790 = vst.msk [vmem:[%s226 + $0x18] sm:$0xf] %vm783, %v757
      %791 = vst.msk [vmem:[%s226 + $0x1c] sm:$0xf] %vm783, %v758
      %792 = vst.msk [vmem:[%s226 + $0x20] sm:$0xf] %vm783, %v759
      %793 = vst.msk [vmem:[%s226 + $0x24] sm:$0xf] %vm783, %v760
      %794 = vst.msk [vmem:[%s226 + $0x28] sm:$0xf] %vm783, %v761
      %795 = vst.msk [vmem:[%s226 + $0x2c] sm:$0xf] %vm783, %v762
      %796 = vst.msk [vmem:[%s226 + $0x30] sm:$0xf] %vm783, %v763
      %797 = vst.msk [vmem:[%s226 + $0x34] sm:$0xf] %vm783, %v764
      %798 = vst.msk [vmem:[%s226 + $0x38] sm:$0xf] %vm783, %v765
      %799 = vst.msk [vmem:[%s226 + $0x3c] sm:$0xf] %vm783, %v766
      %800 = vst.msk [vmem:[%s226 + $0x40] sm:$0xf] %vm783, %v767
      %801 = vst.msk [vmem:[%s226 + $0x44] sm:$0xf] %vm783, %v768
      %802 = vst.msk [vmem:[%s226 + $0x48] sm:$0xf] %vm783, %v769
      %803 = vst.msk [vmem:[%s226 + $0x4c] sm:$0xf] %vm783, %v770
      %804 = vst.msk [vmem:[%s226 + $0x50] sm:$0xf] %vm783, %v771
      %805 = vst.msk [vmem:[%s226 + $0x54] sm:$0xf] %vm783, %v772
      %806 = vst.msk [vmem:[%s226 + $0x58] sm:$0xf] %vm783, %v773
      %807 = vst.msk [vmem:[%s226 + $0x5c] sm:$0xf] %vm783, %v774
      %808 = vst.msk [vmem:[%s226 + $0x60] sm:$0xf] %vm783, %v775
      %809 = vst.msk [vmem:[%s226 + $0x64] sm:$0xf] %vm783, %v776
      %810 = vst.msk [vmem:[%s226 + $0x68] sm:$0xf] %vm783, %v777
      %811 = vst.msk [vmem:[%s226 + $0x6c] sm:$0xf] %vm783, %v778
      %812 = vst.msk [vmem:[%s226 + $0x70] sm:$0xf] %vm783, %v779
      %813 = vst.msk [vmem:[%s226 + $0x74] sm:$0xf] %vm783, %v780
      %814 = vst.msk [vmem:[%s226 + $0x78] sm:$0xf] %vm783, %v781
      %815 = vst.msk [vmem:[%s226 + $0x7c] sm:$0xf] %vm783, %v782
      %s816 = smul.u32 32, %s18
      %p817 = scmp.lt.s32.totalorder %s816, 63
      %s818 = scalar_select %p817, %s816, 63
      %p819 = scmp.lt.s32.totalorder %s19, 0
      %s820 = scalar_select %p819, %s19, 0
      %s821 = sadd.s32 %s820, %s818
      %s822 = smul.addr %s821, 4
      %s823 = scalar_lea.vmem %s3, %s822
      // Predicated region
      $region33: #{stem_fwd.2} parent=31 // pred_check
        %p824 = pneg %p124
      $region34: #{stem_fwd.2} parent=31 // pred_check_branch
        %826 = sbr.rel (%p824) target = $region36
      $region35: #{stem_fwd.2} parent=31 // pred_region
        %s827 = smul.u32 32, %s18
      $region36: #{stem_fwd.2} parent=31 // pred_fallthru
        _
    $region32: #{stem_fwd.2} parent=5 // pred_fallthru
      _
    %p828 = scmp.le.s32.totalorder 2, %s9
    // Predicated region
    $region37: #{stem_fwd.2} parent=5 // pred_check
      %p829 = pneg %p828
    $region38: #{stem_fwd.2} parent=5 // pred_check_branch
      %831 = sbr.rel (%p829) target = $region40
    $region39: #{stem_fwd.2} parent=5 // pred_region
      %s832 = ssub.s32 %s9, 2
      // Predicated region
      $region41: #{stem_fwd.2} parent=39 // pred_check
        %p833 = pneg %p130
      $region42: #{stem_fwd.2} parent=39 // pred_check_branch
        %835 = sbr.rel (%p833) target = $region44
      $region43: #{stem_fwd.2} parent=39 // pred_region
        %s836 = smul.u32 32, %s20
        %p837 = scmp.lt.s32.totalorder %s836, 63
        %s838 = scalar_select %p837, %s836, 63
        %p839 = scmp.lt.s32.totalorder %s21, 0
        %s840 = scalar_select %p839, %s21, 0
        %s841 = sadd.s32 %s840, %s838
        %s842 = smul.addr %s841, 4
        %s843 = scalar_lea.vmem %s3, %s842
      $region44: #{stem_fwd.2} parent=39 // pred_fallthru
        _
    $region40: #{stem_fwd.2} parent=5 // pred_fallthru
      _
  $region6: #{stem_fwd.2} parent=0 // loop_footer
    %s13 = sadd.s32 1, %s9
  $region7: #{stem_fwd.2} parent=0 // loop_footer_branch
    %8 = sbr.rel target = $region3
  $region8: #{stem_fwd.2} parent=0 // loop_exit
    _

// kernel: stem_fwd.3
$region0: #{stem_fwd.3}
  #allocation0 [shape = 'u32[]', space=smem, size = 0x4, offset = 0x4, fixed_abs, tag = 'smem constant byte address 0x4 - core index']
  #allocation1 [shape = 'u32[72,128]{1,0:T(1,128)}', space=vmem, size = 0x9000, scoped, tag = 'internal scratch']
  %s0 = inlined_call_operand.vmem [shape: bf16[2,9,9,64], index: 0, kind: input, shape index: {}]
  %s1 = inlined_call_operand.vmem [shape: bf16[2,9,9,64], index: 1, kind: input, shape index: {}]
  %s2 = inlined_call_operand.vmem [shape: bf16[2,9,9,64], index: 2, kind: input, shape index: {}]
  %s3 = inlined_call_operand.vmem [shape: bf16[2,9,9,64], index: 3, kind: input, shape index: {}]
  %s4 = inlined_call_operand.hbm [shape: bf16[2,8,8,64], index: 4, kind: output, shape index: {}]
  %s5 = sld [smem:[#allocation0]]
  $region49: #{stem_fwd.3} parent=0
    _
  %s7 = ssub.s32 1, %s5
  %s8 = scalar_select 0, %s7, %s5
  $region1: #{stem_fwd.3} parent=0
    #allocation2 [shape = 'u8[32768]{0}', space=vmem, size = 0x8000, scoped, tag = 'output window, operand 0']
    #allocation3 [shape = 's32[2]{0}', space=sflag, size = 0x8, scoped, tag = 'scoped memory for stem_fwd.3']
    %9 = vsyncpa [#allocation3], 0
    %s10 = scalar_lea.sflag [#allocation3], 1
    %11 = vsyncpa %s10, 0
    loop: start=0, step=1, limit=4
    $region2: #{stem_fwd.3} parent=1 // loop_pre_header
      _
    $region3: #{stem_fwd.3} parent=1 // loop_header
      %s13 = sphi 0, %s17
      %p14 = scmp.ge.s32.totalorder %s13, 4
      %s23 = sphi 0, %s25
      %s26 = sphi 0, %s23
      %s27 = sphi 0, %s26
      %s43 = sphi 0, %s27
      %s49 = sphi 0, %s51
      %s52 = sphi 0, %s49
      %s53 = sphi 0, %s52
      %s69 = sphi 0, %s53
      %s75 = sphi 0, %s77
      %s78 = sphi 0, %s75
      %s79 = sphi 0, %s78
      %s95 = sphi 0, %s79
      %s101 = sphi 0, %s103
      %s104 = sphi 0, %s101
      %s105 = sphi 0, %s104
      %s121 = sphi 0, %s105
      %s127 = sphi 0, %s129
      %s130 = sphi 0, %s127
      %s131 = sphi 0, %s130
      %s147 = sphi 0, %s131
    $region4: #{stem_fwd.3} parent=1 // loop_header_branch
      %16 = sbr.rel (%p14) target = $region8
    $region5: #{stem_fwd.3} parent=1 // loop_body
      %s18 = ssub.s32 %s13, 1
      %s19 = ssub.s32 %s13, 2
      %s20 = sadd.s32 %s13, 1
      %s21 = ssub.s32 %s13, %s20
      %p22 = scmp.eq.s32.totalorder %s21, 0
      %s24 = sadd.s32 %s23, 1
      %s25 = scalar_select %p22, %s23, %s24
      %p28 = pneg %p22
      %p29 = scmp.eq.s32.totalorder %s13, 1
      %p30 = por %p28, %p29
      %p31 = scmp.ne.s32.totalorder %s23, %s26
      %p32 = scmp.eq.s32.totalorder %s13, 0
      %p33 = por %p31, %p32
      %p34 = scmp.ne.s32.totalorder %s23, %s26
      %p35 = scmp.eq.s32.totalorder %s18, 1
      %p36 = por %p34, %p35
      %p37 = scmp.ne.s32.totalorder %s26, %s27
      %p38 = scmp.eq.s32.totalorder %s18, 0
      %p39 = por %p37, %p38
      %p40 = scmp.ne.s32.totalorder %s26, %s27
      %p41 = scmp.eq.s32.totalorder %s19, 1
      %p42 = por %p40, %p41
      %p44 = scmp.ne.s32.totalorder %s27, %s43
      %p45 = scmp.eq.s32.totalorder %s19, 0
      %p46 = por %p44, %p45
      %s47 = ssub.s32 %s13, %s20
      %p48 = scmp.eq.s32.totalorder %s47, 0
      %s50 = sadd.s32 %s49, 1
      %s51 = scalar_select %p48, %s49, %s50
      %p54 = pneg %p48
      %p55 = scmp.eq.s32.totalorder %s13, 1
      %p56 = por %p54, %p55
      %p57 = scmp.ne.s32.totalorder %s49, %s52
      %p58 = scmp.eq.s32.totalorder %s13, 0
      %p59 = por %p57, %p58
      %p60 = scmp.ne.s32.totalorder %s49, %s52
      %p61 = scmp.eq.s32.totalorder %s18, 1
      %p62 = por %p60, %p61
      %p63 = scmp.ne.s32.totalorder %s52, %s53
      %p64 = scmp.eq.s32.totalorder %s18, 0
      %p65 = por %p63, %p64
      %p66 = scmp.ne.s32.totalorder %s52, %s53
      %p67 = scmp.eq.s32.totalorder %s19, 1
      %p68 = por %p66, %p67
      %p70 = scmp.ne.s32.totalorder %s53, %s69
      %p71 = scmp.eq.s32.totalorder %s19, 0
      %p72 = por %p70, %p71
      %s73 = ssub.s32 %s13, %s20
      %p74 = scmp.eq.s32.totalorder %s73, 0
      %s76 = sadd.s32 %s75, 1
      %s77 = scalar_select %p74, %s75, %s76
      %p80 = pneg %p74
      %p81 = scmp.eq.s32.totalorder %s13, 1
      %p82 = por %p80, %p81
      %p83 = scmp.ne.s32.totalorder %s75, %s78
      %p84 = scmp.eq.s32.totalorder %s13, 0
      %p85 = por %p83, %p84
      %p86 = scmp.ne.s32.totalorder %s75, %s78
      %p87 = scmp.eq.s32.totalorder %s18, 1
      %p88 = por %p86, %p87
      %p89 = scmp.ne.s32.totalorder %s78, %s79
      %p90 = scmp.eq.s32.totalorder %s18, 0
      %p91 = por %p89, %p90
      %p92 = scmp.ne.s32.totalorder %s78, %s79
      %p93 = scmp.eq.s32.totalorder %s19, 1
      %p94 = por %p92, %p93
      %p96 = scmp.ne.s32.totalorder %s79, %s95
      %p97 = scmp.eq.s32.totalorder %s19, 0
      %p98 = por %p96, %p97
      %s99 = ssub.s32 %s13, %s20
      %p100 = scmp.eq.s32.totalorder %s99, 0
      %s102 = sadd.s32 %s101, 1
      %s103 = scalar_select %p100, %s101, %s102
      %p106 = pneg %p100
      %p107 = scmp.eq.s32.totalorder %s13, 1
      %p108 = por %p106, %p107
      %p109 = scmp.ne.s32.totalorder %s101, %s104
      %p110 = scmp.eq.s32.totalorder %s13, 0
      %p111 = por %p109, %p110
      %p112 = scmp.ne.s32.totalorder %s101, %s104
      %p113 = scmp.eq.s32.totalorder %s18, 1
      %p114 = por %p112, %p113
      %p115 = scmp.ne.s32.totalorder %s104, %s105
      %p116 = scmp.eq.s32.totalorder %s18, 0
      %p117 = por %p115, %p116
      %p118 = scmp.ne.s32.totalorder %s104, %s105
      %p119 = scmp.eq.s32.totalorder %s19, 1
      %p120 = por %p118, %p119
      %p122 = scmp.ne.s32.totalorder %s105, %s121
      %p123 = scmp.eq.s32.totalorder %s19, 0
      %p124 = por %p122, %p123
      %s125 = ssub.s32 %s13, %s20
      %p126 = scmp.eq.s32.totalorder %s125, 0
      %s128 = sadd.s32 %s127, 1
      %s129 = scalar_select %p126, %s127, %s128
      %p132 = pneg %p126
      %p133 = scmp.eq.s32.totalorder %s13, 1
      %p134 = por %p132, %p133
      %p135 = scmp.ne.s32.totalorder %s127, %s130
      %p136 = scmp.eq.s32.totalorder %s13, 0
      %p137 = por %p135, %p136
      %p138 = scmp.ne.s32.totalorder %s127, %s130
      %p139 = scmp.eq.s32.totalorder %s18, 1
      %p140 = por %p138, %p139
      %p141 = scmp.ne.s32.totalorder %s130, %s131
      %p142 = scmp.eq.s32.totalorder %s18, 0
      %p143 = por %p141, %p142
      %p144 = scmp.ne.s32.totalorder %s130, %s131
      %p145 = scmp.eq.s32.totalorder %s19, 1
      %p146 = por %p144, %p145
      %p148 = scmp.ne.s32.totalorder %s131, %s147
      %p149 = scmp.eq.s32.totalorder %s19, 0
      %p150 = por %p148, %p149
      %p151 = scmp.le.s32.totalorder 1, %s13
      %p152 = scmp.lt.s32.totalorder %s13, 3
      %p153 = pnand %p151, %p152
      %p154 = pneg %p153
      // Predicated region
      $region9: #{stem_fwd.3} parent=5 // pred_check
        _
      $region10: #{stem_fwd.3} parent=5 // pred_check_branch
        %156 = sbr.rel (%p153) target = $region12
      $region11: #{stem_fwd.3} parent=5 // pred_region
        %s157 = ssub.s32 %s13, 1
      $region12: #{stem_fwd.3} parent=5 // pred_fallthru
        _
      %p158 = scmp.lt.s32.totalorder %s13, 2
      // Predicated region
      $region13: #{stem_fwd.3} parent=5 // pred_check
        %p159 = pneg %p158
      $region14: #{stem_fwd.3} parent=5 // pred_check_branch
        %161 = sbr.rel (%p159) target = $region16
      $region15: #{stem_fwd.3} parent=5 // pred_region
        // Predicated region
        $region17: #{stem_fwd.3} parent=15 // pred_check
          %p162 = pneg %p33
        $region18: #{stem_fwd.3} parent=15 // pred_check_branch
          %164 = sbr.rel (%p162) target = $region20
        $region19: #{stem_fwd.3} parent=15 // pred_region
          %p165 = scmp.lt.s32.totalorder %s13, 1
          %s166 = scalar_select %p165, %s13, 1
          %s167 = smul.addr %s166, 18
          %s168 = smul.addr %s167, 4
          %s169 = scalar_lea.vmem %s0, %s168
        $region20: #{stem_fwd.3} parent=15 // pred_fallthru
          _
        // Predicated region
        $region21: #{stem_fwd.3} parent=15 // pred_check
          %p170 = pneg %p59
        $region22: #{stem_fwd.3} parent=15 // pred_check_branch
          %172 = sbr.rel (%p170) target = $region24
        $region23: #{stem_fwd.3} parent=15 // pred_region
          %p173 = scmp.lt.s32.totalorder %s13, 1
          %s174 = scalar_select %p173, %s13, 1
          %s175 = smul.addr %s174, 18
          %s176 = smul.addr %s175, 4
          %s177 = scalar_lea.vmem %s1, %s176
        $region24: #{stem_fwd.3} parent=15 // pred_fallthru
          _
        // Predicated region
        $region25: #{stem_fwd.3} parent=15 // pred_check
          %p178 = pneg %p85
        $region26: #{stem_fwd.3} parent=15 // pred_check_branch
          %180 = sbr.rel (%p178) target = $region28
        $region27: #{stem_fwd.3} parent=15 // pred_region
          %p181 = scmp.lt.s32.totalorder %s13, 1
          %s182 = scalar_select %p181, %s13, 1
          %s183 = smul.addr %s182, 18
          %s184 = smul.addr %s183, 4
          %s185 = scalar_lea.vmem %s2, %s184
        $region28: #{stem_fwd.3} parent=15 // pred_fallthru
          _
        // Predicated region
        $region29: #{stem_fwd.3} parent=15 // pred_check
          %p186 = pneg %p111
        $region30: #{stem_fwd.3} parent=15 // pred_check_branch
          %188 = sbr.rel (%p186) target = $region32
        $region31: #{stem_fwd.3} parent=15 // pred_region
          %p189 = scmp.lt.s32.totalorder %s13, 1
          %s190 = scalar_select %p189, %s13, 1
          %s191 = smul.addr %s190, 18
          %s192 = smul.addr %s191, 4
          %s193 = scalar_lea.vmem %s3, %s192
        $region32: #{stem_fwd.3} parent=15 // pred_fallthru
          _
      $region16: #{stem_fwd.3} parent=5 // pred_fallthru
        _
      %p194 = scmp.le.s32.totalorder 1, %s13
      %p195 = scmp.lt.s32.totalorder %s13, 3
      %p196 = pnand %p194, %p195
      %p197 = pneg %p196
      // Predicated region
      $region33: #{stem_fwd.3} parent=5 // pred_check
        _
      $region34: #{stem_fwd.3} parent=5 // pred_check_branch
        %199 = sbr.rel (%p196) target = $region36
      $region35: #{stem_fwd.3} parent=5 // pred_region
        %s200 = ssub.s32 %s13, 1
        %p201 = scmp.lt.s32.totalorder %s18, 1
        %s202 = scalar_select %p201, %s18, 1
        %s203 = smul.addr %s202, 18
        %s204 = smul.addr %s203, 4
        %s205 = scalar_lea.vmem %s0, %s204
        %p206 = pneg %p39
        %p207 = pneg %p36
        %p208 = scmp.lt.s32.totalorder %s18, 1
        %s209 = scalar_select %p208, %s18, 1
        %s210 = smul.addr %s209, 18
        %s211 = smul.addr %s210, 4
        %s212 = scalar_lea.vmem %s1, %s211
        %p213 = pneg %p65
        %p214 = pneg %p62
        %p215 = scmp.lt.s32.totalorder %s18, 1
        %s216 = scalar_select %p215, %s18, 1
        %s217 = smul.addr %s216, 18
        %s218 = smul.addr %s217, 4
        %s219 = scalar_lea.vmem %s2, %s218
        %p220 = pneg %p91
        %p221 = pneg %p88
        %p222 = scmp.lt.s32.totalorder %s18, 1
        %s223 = scalar_select %p222, %s18, 1
        %s224 = smul.addr %s223, 18
        %s225 = smul.addr %s224, 4
        %s226 = scalar_lea.vmem %s3, %s225
        %p227 = pneg %p117
        %p228 = pneg %p114
        %p229 = pneg %p143
        %p230 = pneg %p140
        %s231 = sand.u32 %s130, 1
        %s232 = scalar_lea.sflag [#allocation3], %s231
        %s233 = sand.u32 %s130, 1
        %s234 = smul.addr %s233, 32
        %s235 = scalar_lea.vmem [#allocation2], %s234
        %p236 = scmp.lt.s32.totalorder %s18, 1
        %s237 = scalar_select %p236, %s18, 1
        %s238 = smul.addr %s237, 18
        %s239 = smul.addr %s238, 4
        %s240 = scalar_lea.vmem %s0, %s239
        %p241 = scmp.lt.s32.totalorder %s18, 1
        %s242 = scalar_select %p241, %s18, 1
        %s243 = smul.addr %s242, 18
        %s244 = smul.addr %s243, 4
        %s245 = scalar_lea.vmem %s1, %s244
        %p246 = scmp.lt.s32.totalorder %s18, 1
        %s247 = scalar_select %p246, %s18, 1
        %s248 = smul.addr %s247, 18
        %s249 = smul.addr %s248, 4
        %s250 = scalar_lea.vmem %s2, %s249
        %p251 = scmp.lt.s32.totalorder %s18, 1
        %s252 = scalar_select %p251, %s18, 1
        %s253 = smul.addr %s252, 18
        %s254 = smul.addr %s253, 4
        %s255 = scalar_lea.vmem %s3, %s254
        %v256 = vld [vmem:[%s240] sm:$0xf]
        %v257 = vld [vmem:[%s240 + $0x4] sm:$0x1]
        %v258 = vld [vmem:[%s240 + $0x8] sm:$0xf]
        %v259 = vld [vmem:[%s240 + $0xc] sm:$0x1]
        %v260 = vld [vmem:[%s240 + $0x10] sm:$0xf]
        %v261 = vld [vmem:[%s240 + $0x14] sm:$0x1]
        %v262 = vld [vmem:[%s240 + $0x18] sm:$0xf]
        %v263 = vld [vmem:[%s240 + $0x1c] sm:$0x1]
        %v264 = vld [vmem:[%s240 + $0x20] sm:$0xf]
        %v265 = vld [vmem:[%s240 + $0x24] sm:$0x1]
        %v266 = vld [vmem:[%s240 + $0x28] sm:$0xf]
        %v267 = vld [vmem:[%s240 + $0x2c] sm:$0x1]
        %v268 = vld [vmem:[%s240 + $0x30] sm:$0xf]
        %v269 = vld [vmem:[%s240 + $0x34] sm:$0x1]
        %v270 = vld [vmem:[%s240 + $0x38] sm:$0xf]
        %v271 = vld [vmem:[%s240 + $0x3c] sm:$0x1]
        %v272 = vld [vmem:[%s240 + $0x40] sm:$0xf]
        %v273 = vld [vmem:[%s240 + $0x44] sm:$0x1]
        %v274 = vld [vmem:[%s245] sm:$0xf]
        %v275 = vld [vmem:[%s245 + $0x8] sm:$0xf]
        %v276 = vld [vmem:[%s245 + $0x10] sm:$0xf]
        %v277 = vld [vmem:[%s245 + $0x18] sm:$0xf]
        %v278 = vld [vmem:[%s245 + $0x20] sm:$0xf]
        %v279 = vld [vmem:[%s245 + $0x28] sm:$0xf]
        %v280 = vld [vmem:[%s245 + $0x30] sm:$0xf]
        %v281 = vld [vmem:[%s245 + $0x38] sm:$0xf]
        %v282 = vld [vmem:[%s245 + $0x40] sm:$0xf]
        %v283 = vld [vmem:[%s250] sm:$0xf]
        %v284 = vld [vmem:[%s250 + $0x4] sm:$0x1]
        %v285 = vld [vmem:[%s250 + $0x8] sm:$0xf]
        %v286 = vld [vmem:[%s250 + $0xc] sm:$0x1]
        %v287 = vld [vmem:[%s250 + $0x10] sm:$0xf]
        %v288 = vld [vmem:[%s250 + $0x14] sm:$0x1]
        %v289 = vld [vmem:[%s250 + $0x18] sm:$0xf]
        %v290 = vld [vmem:[%s250 + $0x1c] sm:$0x1]
        %v291 = vld [vmem:[%s250 + $0x20] sm:$0xf]
        %v292 = vld [vmem:[%s250 + $0x24] sm:$0x1]
        %v293 = vld [vmem:[%s250 + $0x28] sm:$0xf]
        %v294 = vld [vmem:[%s250 + $0x2c] sm:$0x1]
        %v295 = vld [vmem:[%s250 + $0x30] sm:$0xf]
        %v296 = vld [vmem:[%s250 + $0x34] sm:$0x1]
        %v297 = vld [vmem:[%s250 + $0x38] sm:$0xf]
        %v298 = vld [vmem:[%s250 + $0x3c] sm:$0x1]
        %v299 = vld [vmem:[%s255] sm:$0xf]
        %v300 = vld [vmem:[%s255 + $0x8] sm:$0xf]
        %v301 = vld [vmem:[%s255 + $0x10] sm:$0xf]
        %v302 = vld [vmem:[%s255 + $0x18] sm:$0xf]
        %v303 = vld [vmem:[%s255 + $0x20] sm:$0xf]
        %v304 = vld [vmem:[%s255 + $0x28] sm:$0xf]
        %v305 = vld [vmem:[%s255 + $0x30] sm:$0xf]
        %v306 = vld [vmem:[%s255 + $0x38] sm:$0xf]
        %v307 = vunpack.c.l.bf16 %v256
        %v308 = vunpack.c.l.bf16 %v258
        %v309 = vunpack.c.l.bf16 %v260
        %v310 = vunpack.c.l.bf16 %v262
        %v311 = vunpack.c.l.bf16 %v264
        %v312 = vunpack.c.l.bf16 %v266
        %v313 = vunpack.c.l.bf16 %v268
        %v314 = vunpack.c.l.bf16 %v270
        %v315 = vunpack.c.l.bf16 %v274
        %v316 = vunpack.c.l.bf16 %v275
        %v317 = vunpack.c.l.bf16 %v276
        %v318 = vunpack.c.l.bf16 %v277
        %v319 = vunpack.c.l.bf16 %v278
        %v320 = vunpack.c.l.bf16 %v279
        %v321 = vunpack.c.l.bf16 %v280
        %v322 = vunpack.c.l.bf16 %v281
        %v323 = vmax.f32 %v307, %v315
        %v324 = vmax.f32 %v308, %v316
        %v325 = vmax.f32 %v309, %v317
        %v326 = vmax.f32 %v310, %v318
        %v327 = vmax.f32 %v311, %v319
        %v328 = vmax.f32 %v312, %v320
        %v329 = vmax.f32 %v313, %v321
        %v330 = vmax.f32 %v314, %v322
        %v331 = vpack.c.bf16 %v323, %v323
        %v332 = vpack.c.bf16 %v324, %v324
        %v333 = vpack.c.bf16 %v325, %v325
        %v334 = vpack.c.bf16 %v326, %v326
        %v335 = vpack.c.bf16 %v327, %v327
        %v336 = vpack.c.bf16 %v328, %v328
        %v337 = vpack.c.bf16 %v329, %v329
        %v338 = vpack.c.bf16 %v330, %v330
        %v339 = vunpack.c.l.bf16 %v331
        %v340 = vunpack.c.l.bf16 %v332
        %v341 = vunpack.c.l.bf16 %v333
        %v342 = vunpack.c.l.bf16 %v334
        %v343 = vunpack.c.l.bf16 %v335
        %v344 = vunpack.c.l.bf16 %v336
        %v345 = vunpack.c.l.bf16 %v337
        %v346 = vunpack.c.l.bf16 %v338
        %v347 = vunpack.c.l.bf16 %v257
        %v348 = vunpack.c.l.bf16 %v259
        %v349 = vunpack.c.l.bf16 %v261
        %v350 = vunpack.c.l.bf16 %v263
        %v351 = vunpack.c.l.bf16 %v265
        %v352 = vunpack.c.l.bf16 %v267
        %v353 = vunpack.c.l.bf16 %v269
        %v354 = vunpack.c.l.bf16 %v271
        %vm371 = vcmask 1046528
        %v372 = vrot.slane %v307, 1
        %v373 = vrot.slane %v347, 1
        %v374 = vsel %vm371, %v372, %v373
        %v375 = vrot.slane %v308, 1
        %v376 = vrot.slane %v348, 1
        %v377 = vsel %vm371, %v375, %v376
        %v378 = vrot.slane %v309, 1
        %v379 = vrot.slane %v349, 1
        %v380 = vsel %vm371, %v378, %v379
        %v381 = vrot.slane %v310, 1
        %v382 = vrot.slane %v350, 1
        %v383 = vsel %vm371, %v381, %v382
        %v384 = vrot.slane %v311, 1
        %v385 = vrot.slane %v351, 1
        %v386 = vsel %vm371, %v384, %v385
        %v387 = vrot.slane %v312, 1
        %v388 = vrot.slane %v352, 1
        %v389 = vsel %vm371, %v387, %v388
        %v390 = vrot.slane %v313, 1
        %v391 = vrot.slane %v353, 1
        %v392 = vsel %vm371, %v390, %v391
        %v393 = vrot.slane %v314, 1
        %v394 = vrot.slane %v354, 1
        %v395 = vsel %vm371, %v393, %v394
        %v404 = vmax.f32 %v339, %v374
        %v405 = vmax.f32 %v340, %v377
        %v406 = vmax.f32 %v341, %v380
        %v407 = vmax.f32 %v342, %v383
        %v408 = vmax.f32 %v343, %v386
        %v409 = vmax.f32 %v344, %v389
        %v410 = vmax.f32 %v345, %v392
        %v411 = vmax.f32 %v346, %v395
        %v412 = vpack.c.bf16 %v404, %v404
        %v413 = vpack.c.bf16 %v405, %v405
        %v414 = vpack.c.bf16 %v406, %v406
        %v415 = vpack.c.bf16 %v407, %v407
        %v416 = vpack.c.bf16 %v408, %v408
        %v417 = vpack.c.bf16 %v409, %v409
        %v418 = vpack.c.bf16 %v410, %v410
        %v419 = vpack.c.bf16 %v411, %v411
        %v420 = vunpack.c.l.bf16 %v412
        %v421 = vunpack.c.l.bf16 %v413
        %v422 = vunpack.c.l.bf16 %v414
        %v423 = vunpack.c.l.bf16 %v415
        %v424 = vunpack.c.l.bf16 %v416
        %v425 = vunpack.c.l.bf16 %v417
        %v426 = vunpack.c.l.bf16 %v418
        %v427 = vunpack.c.l.bf16 %v419
        %v428 = vunpack.c.l.bf16 %v283
        %v429 = vunpack.c.l.bf16 %v285
        %v430 = vunpack.c.l.bf16 %v287
        %v431 = vunpack.c.l.bf16 %v289
        %v432 = vunpack.c.l.bf16 %v291
        %v433 = vunpack.c.l.bf16 %v293
        %v434 = vunpack.c.l.bf16 %v295
        %v435 = vunpack.c.l.bf16 %v297
        %v436 = vmax.f32 %v420, %v428
        %v437 = vmax.f32 %v421, %v429
        %v438 = vmax.f32 %v422, %v430
        %v439 = vmax.f32 %v423, %v431
        %v440 = vmax.f32 %v424, %v432
        %v441 = vmax.f32 %v425, %v433
        %v442 = vmax.f32 %v426, %v434
        %v443 = vmax.f32 %v427, %v435
        %v444 = vpack.c.bf16 %v436, %v436
        %v445 = vpack.c.bf16 %v437, %v437
        %v446 = vpack.c.bf16 %v438, %v438
        %v447 = vpack.c.bf16 %v439, %v439
        %v448 = vpack.c.bf16 %v440, %v440
        %v449 = vpack.c.bf16 %v441, %v441
        %v450 = vpack.c.bf16 %v442, %v442
        %v451 = vpack.c.bf16 %v443, %v443
        %v452 = vunpack.c.l.bf16 %v444
        %v453 = vunpack.c.l.bf16 %v445
        %v454 = vunpack.c.l.bf16 %v446
        %v455 = vunpack.c.l.bf16 %v447
        %v456 = vunpack.c.l.bf16 %v448
        %v457 = vunpack.c.l.bf16 %v449
        %v458 = vunpack.c.l.bf16 %v450
        %v459 = vunpack.c.l.bf16 %v451
        %v460 = vunpack.c.l.bf16 %v299
        %v461 = vunpack.c.l.bf16 %v300
        %v462 = vunpack.c.l.bf16 %v301
        %v463 = vunpack.c.l.bf16 %v302
        %v464 = vunpack.c.l.bf16 %v303
        %v465 = vunpack.c.l.bf16 %v304
        %v466 = vunpack.c.l.bf16 %v305
        %v467 = vunpack.c.l.bf16 %v306
        %v468 = vmax.f32 %v452, %v460
        %v469 = vmax.f32 %v453, %v461
        %v470 = vmax.f32 %v454, %v462
        %v471 = vmax.f32 %v455, %v463
        %v472 = vmax.f32 %v456, %v464
        %v473 = vmax.f32 %v457, %v465
        %v474 = vmax.f32 %v458, %v466
        %v475 = vmax.f32 %v459, %v467
        %v476 = vpack.c.bf16 %v468, %v468
        %v477 = vpack.c.bf16 %v469, %v469
        %v478 = vpack.c.bf16 %v470, %v470
        %v479 = vpack.c.bf16 %v471, %v471
        %v480 = vpack.c.bf16 %v472, %v472
        %v481 = vpack.c.bf16 %v473, %v473
        %v482 = vpack.c.bf16 %v474, %v474
        %v483 = vpack.c.bf16 %v475, %v475
        %v484 = vunpack.c.l.bf16 %v476
        %v485 = vunpack.c.l.bf16 %v477
        %v486 = vunpack.c.l.bf16 %v478
        %v487 = vunpack.c.l.bf16 %v479
        %v488 = vunpack.c.l.bf16 %v480
        %v489 = vunpack.c.l.bf16 %v481
        %v490 = vunpack.c.l.bf16 %v482
        %v491 = vunpack.c.l.bf16 %v483
        %v492 = vunpack.c.l.bf16 %v284
        %v493 = vunpack.c.l.bf16 %v286
        %v494 = vunpack.c.l.bf16 %v288
        %v495 = vunpack.c.l.bf16 %v290
        %v496 = vunpack.c.l.bf16 %v292
        %v497 = vunpack.c.l.bf16 %v294
        %v498 = vunpack.c.l.bf16 %v296
        %v499 = vunpack.c.l.bf16 %v298
        %v516 = vrot.slane %v428, 1
        %v517 = vrot.slane %v492, 1
        %v518 = vsel %vm371, %v516, %v517
        %v519 = vrot.slane %v429, 1
        %v520 = vrot.slane %v493, 1
        %v521 = vsel %vm371, %v519, %v520
        %v522 = vrot.slane %v430, 1
        %v523 = vrot.slane %v494, 1
        %v524 = vsel %vm371, %v522, %v523
        %v525 = vrot.slane %v431, 1
        %v526 = vrot.slane %v495, 1
        %v527 = vsel %vm371, %v525, %v526
        %v528 = vrot.slane %v432, 1
        %v529 = vrot.slane %v496, 1
        %v530 = vsel %vm371, %v528, %v529
        %v531 = vrot.slane %v433, 1
        %v532 = vrot.slane %v497, 1
        %v533 = vsel %vm371, %v531, %v532
        %v534 = vrot.slane %v434, 1
        %v535 = vrot.slane %v498, 1
        %v536 = vsel %vm371, %v534, %v535
        %v537 = vrot.slane %v435, 1
        %v538 = vrot.slane %v499, 1
        %v539 = vsel %vm371, %v537, %v538
        %v548 = vmax.f32 %v484, %v518
        %v549 = vmax.f32 %v485, %v521
        %v550 = vmax.f32 %v486, %v524
        %v551 = vmax.f32 %v487, %v527
        %v552 = vmax.f32 %v488, %v530
        %v553 = vmax.f32 %v489, %v533
        %v554 = vmax.f32 %v490, %v536
        %v555 = vmax.f32 %v491, %v539
        %v556 = vpack.c.bf16 %v548, %v548
        %v557 = vpack.c.bf16 %v549, %v549
        %v558 = vpack.c.bf16 %v550, %v550
        %v559 = vpack.c.bf16 %v551, %v551
        %v560 = vpack.c.bf16 %v552, %v552
        %v561 = vpack.c.bf16 %v553, %v553
        %v562 = vpack.c.bf16 %v554, %v554
        %v563 = vpack.c.bf16 %v555, %v555
        %v564 = vunpack.c.l.bf16 %v556
        %v565 = vunpack.c.l.bf16 %v557
        %v566 = vunpack.c.l.bf16 %v558
        %v567 = vunpack.c.l.bf16 %v559
        %v568 = vunpack.c.l.bf16 %v560
        %v569 = vunpack.c.l.bf16 %v561
        %v570 = vunpack.c.l.bf16 %v562
        %v571 = vunpack.c.l.bf16 %v563
        %v572 = vunpack.c.l.bf16 %v272
        %v573 = vmax.f32 %v564, %v308
        %v574 = vmax.f32 %v565, %v309
        %v575 = vmax.f32 %v566, %v310
        %v576 = vmax.f32 %v567, %v311
        %v577 = vmax.f32 %v568, %v312
        %v578 = vmax.f32 %v569, %v313
        %v579 = vmax.f32 %v570, %v314
        %v580 = vmax.f32 %v571, %v572
        %v581 = vpack.c.bf16 %v573, %v573
        %v582 = vpack.c.bf16 %v574, %v574
        %v583 = vpack.c.bf16 %v575, %v575
        %v584 = vpack.c.bf16 %v576, %v576
        %v585 = vpack.c.bf16 %v577, %v577
        %v586 = vpack.c.bf16 %v578, %v578
        %v587 = vpack.c.bf16 %v579, %v579
        %v588 = vpack.c.bf16 %v580, %v580
        %v589 = vunpack.c.l.bf16 %v581
        %v590 = vunpack.c.l.bf16 %v582
        %v591 = vunpack.c.l.bf16 %v583
        %v592 = vunpack.c.l.bf16 %v584
        %v593 = vunpack.c.l.bf16 %v585
        %v594 = vunpack.c.l.bf16 %v586
        %v595 = vunpack.c.l.bf16 %v587
        %v596 = vunpack.c.l.bf16 %v588
        %v597 = vunpack.c.l.bf16 %v282
        %v598 = vmax.f32 %v589, %v316
        %v599 = vmax.f32 %v590, %v317
        %v600 = vmax.f32 %v591, %v318
        %v601 = vmax.f32 %v592, %v319
        %v602 = vmax.f32 %v593, %v320
        %v603 = vmax.f32 %v594, %v321
        %v604 = vmax.f32 %v595, %v322
        %v605 = vmax.f32 %v596, %v597
        %v606 = vpack.c.bf16 %v598, %v598
        %v607 = vpack.c.bf16 %v599, %v599
        %v608 = vpack.c.bf16 %v600, %v600
        %v609 = vpack.c.bf16 %v601, %v601
        %v610 = vpack.c.bf16 %v602, %v602
        %v611 = vpack.c.bf16 %v603, %v603
        %v612 = vpack.c.bf16 %v604, %v604
        %v613 = vpack.c.bf16 %v605, %v605
        %v614 = vunpack.c.l.bf16 %v606
        %v615 = vunpack.c.l.bf16 %v607
        %v616 = vunpack.c.l.bf16 %v608
        %v617 = vunpack.c.l.bf16 %v609
        %v618 = vunpack.c.l.bf16 %v610
        %v619 = vunpack.c.l.bf16 %v611
        %v620 = vunpack.c.l.bf16 %v612
        %v621 = vunpack.c.l.bf16 %v613
        %v622 = vunpack.c.l.bf16 %v273
        %v625 = vrot.slane %v572, 1
        %v626 = vrot.slane %v622, 1
        %v627 = vsel %vm371, %v625, %v626
        %v629 = vmax.f32 %v614, %v377
        %v630 = vmax.f32 %v615, %v380
        %v631 = vmax.f32 %v616, %v383
        %v632 = vmax.f32 %v617, %v386
        %v633 = vmax.f32 %v618, %v389
        %v634 = vmax.f32 %v619, %v392
        %v635 = vmax.f32 %v620, %v395
        %v636 = vmax.f32 %v621, %v627
        %v637 = vpack.c.bf16 %v629, %v629
        %v638 = vpack.c.bf16 %v630, %v630
        %v639 = vpack.c.bf16 %v631, %v631
        %v640 = vpack.c.bf16 %v632, %v632
        %v641 = vpack.c.bf16 %v633, %v633
        %v642 = vpack.c.bf16 %v634, %v634
        %v643 = vpack.c.bf16 %v635, %v635
        %v644 = vpack.c.bf16 %v636, %v636
        %vm645 = vcmask 519168
        %646 = vst.msk [vmem:[%s235] sm:$0xf] %vm645, %v637
        %647 = vst.msk [vmem:[%s235 + $0x4] sm:$0xf] %vm645, %v638
        %648 = vst.msk [vmem:[%s235 + $0x8] sm:$0xf] %vm645, %v639
        %649 = vst.msk [vmem:[%s235 + $0xc] sm:$0xf] %vm645, %v640
        %650 = vst.msk [vmem:[%s235 + $0x10] sm:$0xf] %vm645, %v641
        %651 = vst.msk [vmem:[%s235 + $0x14] sm:$0xf] %vm645, %v642
        %652 = vst.msk [vmem:[%s235 + $0x18] sm:$0xf] %vm645, %v643
        %653 = vst.msk [vmem:[%s235 + $0x1c] sm:$0xf] %vm645, %v644
        %s654 = sand.u32 %s130, 1
        %s655 = scalar_lea.sflag [#allocation3], %s654
        %s656 = sand.u32 %s130, 1
        %s657 = smul.addr %s656, 32
        %s658 = scalar_lea.vmem [#allocation2], %s657
        // Predicated region
        $region37: #{stem_fwd.3} parent=35 // pred_check
          %p659 = pneg %p140
        $region38: #{stem_fwd.3} parent=35 // pred_check_branch
          %661 = sbr.rel (%p659) target = $region40
        $region39: #{stem_fwd.3} parent=35 // pred_region
          %663 = vsyncadd %s655, 0
          %s664 = smul.addr %s18, 8
          %s665 = smul.addr %s664, 4
          %s666 = scalar_lea.hbm %s4, %s665
          %s667 = sshll.u32 %s658, 4
          %s668 = int_to_ptr.vmem [resolvable:$true] %s667
          %s669 = sshll.u32 %s666, 4
          %s670 = int_to_ptr.hbm [resolvable:$true] %s669
          %675 = dma.vmem_to_hbm [thread:$0]  %s668, 512, %s670, %s655, 64, 64, 4
        $region40: #{stem_fwd.3} parent=35 // pred_fallthru
          _
      $region36: #{stem_fwd.3} parent=5 // pred_fallthru
        _
      %p676 = scmp.le.s32.totalorder 2, %s13
      // Predicated region
      $region41: #{stem_fwd.3} parent=5 // pred_check
        %p677 = pneg %p676
      $region42: #{stem_fwd.3} parent=5 // pred_check_branch
        %679 = sbr.rel (%p677) target = $region44
      $region43: #{stem_fwd.3} parent=5 // pred_region
        %s680 = ssub.s32 %s13, 2
        // Predicated region
        $region45: #{stem_fwd.3} parent=43 // pred_check
          %p681 = pneg %p146
        $region46: #{stem_fwd.3} parent=43 // pred_check_branch
          %683 = sbr.rel (%p681) target = $region48
        $region47: #{stem_fwd.3} parent=43 // pred_region
          %s684 = sand.u32 %s131, 1
          %s685 = scalar_lea.sflag [#allocation3], %s684
          %s686 = sand.u32 %s131, 1
          %s687 = smul.addr %s686, 32
          %s688 = scalar_lea.vmem [#allocation2], %s687
          %690 = dma.done %s685, 512
        $region48: #{stem_fwd.3} parent=43 // pred_fallthru
          _
      $region44: #{stem_fwd.3} parent=5 // pred_fallthru
        _
    $region6: #{stem_fwd.3} parent=1 // loop_footer
      %s17 = sadd.s32 1, %s13
    $region7: #{stem_fwd.3} parent=1 // loop_footer_branch
      %12 = sbr.rel target = $region3
    $region8: #{stem_fwd.3} parent=1 // loop_exit
      _
    %691 = vsyncpa [#allocation3], 1
    %s692 = scalar_lea.sflag [#allocation3], 1
    %693 = vsyncpa %s692, 1

</llo_original>
